<compile_context>
chip_gen: v7x
topology: tpu7x:2x2x1
jax: 0.10.0
libtpu: 0.0.40
codegen_flags: <defaults>
</compile_context>

<pallas_src>
import jax
import jax.numpy as jnp
from jax.experimental import pallas as pl
from jax.experimental.pallas import tpu as pltpu

LN_EPS = 1e-12  # both the adapter LN and BERT's output LN use eps=1e-12


def _layernorm_f32(x, gamma, beta, eps):
    """Two-pass LayerNorm over the last axis in f32 (numerically robust)."""
    mu = jnp.mean(x, axis=-1, keepdims=True)
    xc = x - mu
    var = jnp.mean(xc * xc, axis=-1, keepdims=True)
    return xc * jax.lax.rsqrt(var + eps) * gamma + beta


def _adapter_down_ln(x, w_down_ref, pa_ref):
    """down-project -> +bias -> adapter LayerNorm (f32). pa_ref rows: b_down, gamma, beta."""
    down = jnp.dot(x, w_down_ref[...], preferred_element_type=jnp.float32)
    down = down + pa_ref[0:1, :]
    # TODO(synk): adapter dropout (p=0.5) and the self-output dropout are identity in eval
    # mode; training-mode RNG masking is not emitted.
    return _layernorm_f32(down, pa_ref[1:2, :], pa_ref[2:3, :], LN_EPS)


def _finish(acc, x, ph_ref, o_ref):
    """acc = dense(hs) + up(down_ln); add biases + doubled residual, final LayerNorm."""
    acc = acc + ph_ref[0:1, :]                # b_dense + b_up (pre-summed, f32)
    acc = acc + 2.0 * x.astype(jnp.float32)   # adapter residual (x) + final residual (x)
    out = _layernorm_f32(acc, ph_ref[1:2, :], ph_ref[2:3, :], LN_EPS)
    o_ref[...] = out.astype(o_ref.dtype)


def fused_kernel(hs_ref, inp_ref, w_down_ref, w_cat_ref, pa_ref, ph_ref, o_ref):
    """Single fused MXU pass: concat([hs, down_ln]) @ [w_dense ; w_up]."""
    x = inp_ref[...]
    down = _adapter_down_ln(x, w_down_ref, pa_ref)
    cat = jnp.concatenate([hs_ref[...], down.astype(w_cat_ref.dtype)], axis=-1)
    acc = jnp.dot(cat, w_cat_ref[...], preferred_element_type=jnp.float32)
    _finish(acc, x, ph_ref, o_ref)


def unfused_kernel(hs_ref, inp_ref, w_down_ref, w_cat_ref, pa_ref, ph_ref, o_ref):
    """Fallback: identical math, two MXU passes (no in-kernel lane concat)."""
    H = hs_ref.shape[-1]
    A = w_down_ref.shape[-1]
    x = inp_ref[...]
    down = _adapter_down_ln(x, w_down_ref, pa_ref)
    acc = jnp.dot(hs_ref[...], w_cat_ref[0:H, :], preferred_element_type=jnp.float32)
    acc = acc + jnp.dot(down.astype(w_cat_ref.dtype), w_cat_ref[H:H + A, :],
                        preferred_element_type=jnp.float32)
    _finish(acc, x, ph_ref, o_ref)


def _row_tile(M, tm, act_itemsize):
    """Pick the row-tile size: multiple of 256 when big, sublane-aligned otherwise."""
    sub = 16 if act_itemsize < 4 else 8   # bf16 packs 2 rows per sublane
    tm = max(sub, min(tm, M))
    if tm >= 256:
        tm = (tm // 256) * 256
    else:
        tm = (tm // sub) * sub
    # Keep both v7x TensorCores busy: >= 2 row tiles whenever alignment allows it.
    if pl.cdiv(M, tm) < 2 and M >= 2 * sub:
        tm = max(sub, (((M + 1) // 2) // sub) * sub)
    return tm


def _vmem_limit_bytes(tm, H, A, act_itemsize, w_itemsize):
    row = tm * H
    need = (
        2 * 2 * row * act_itemsize                  # hs + inp row tiles, double-buffered
        + 2 * row * act_itemsize                    # output row tile, double-buffered
        + 2 * ((H + A) * H + H * A) * w_itemsize    # resident weights (worst case 2 bufs)
        + 2 * 3 * (A + H) * 4                       # packed small params (f32)
        + 6 * row * 4                               # f32 accumulators / LN temporaries
        + (4 << 20)                                 # headroom
    )
    # Floor above the scoped defaults; cap at v7x physical VMEM (64 MiB).
    return int(min(max(need, 32 << 20), 64 << 20))


def bert_adapted_self_output(hidden_states, input_tensor, params, *, tm=512):
    """hidden_states, input_tensor: [B, S, H]. Returns [B, S, H]."""
    B, S, H = hidden_states.shape
    A = params["w_down"].shape[1]
    M = B * S
    act_itemsize = jnp.dtype(hidden_states.dtype).itemsize
    w_dt = params["w_dense"].dtype
    w_itemsize = jnp.dtype(w_dt).itemsize

    tm = _row_tile(M, tm, act_itemsize)
    grid_m = pl.cdiv(M, tm)

    hs2 = hidden_states.reshape(M, H)
    in2 = input_tensor.reshape(M, H)

    # Fused [H+A, H] weight (w_dense stacked over w_up); biases pre-summed; small params
    # packed into two resident f32 arrays ([3,A]: b_down/gamma/beta, [3,H]: bias/gamma/beta).
    w_cat = jnp.concatenate([params["w_dense"], params["w_up"].astype(w_dt)], axis=0)
    pa = jnp.concatenate(
        [params["b_down"], params["g_dln"], params["b_dln"]], axis=0).astype(jnp.float32)
    b_sum = params["b_dense"].astype(jnp.float32) + params["b_up"].astype(jnp.float32)
    ph = jnp.concatenate(
        [b_sum, params["g_out"].astype(jnp.float32), params["b_out"].astype(jnp.float32)],
        axis=0)

    row_spec = pl.BlockSpec((tm, H), lambda i: (i, 0))

    cost = pl.CostEstimate(
        flops=2 * M * H * (H + 2 * A) + 14 * M * H,
        transcendentals=2 * M,                       # one rsqrt per row per LayerNorm
        bytes_accessed=3 * M * H * act_itemsize
        + ((H + A) * H + H * A) * w_itemsize + 3 * (A + H) * 4,
    )
    cparams = pltpu.CompilerParams(
        dimension_semantics=("parallel",),           # shards row tiles across v7x's 2 TCs
        vmem_limit_bytes=_vmem_limit_bytes(tm, H, A, act_itemsize, w_itemsize),
    )

    def build(kernel, single_buffer):
        def resident(shape):
            kwargs = {"pipeline_mode": pl.Buffered(1)} if single_buffer else {}
            return pl.BlockSpec(shape, lambda i: (0,) * len(shape), **kwargs)
        return pl.pallas_call(
            kernel,
            out_shape=jax.ShapeDtypeStruct((M, H), hidden_states.dtype),
            grid_spec=pltpu.PrefetchScalarGridSpec(
                num_scalar_prefetch=0,
                grid=(grid_m,),
                in_specs=[
                    row_spec,                    # hidden_states row tile
                    row_spec,                    # input_tensor row tile
                    resident((H, A)),            # w_down
                    resident((H + A, H)),        # [w_dense ; w_up]
                    resident((3, A)),            # b_down / adapter LN gamma / beta
                    resident((3, H)),            # (b_dense+b_up) / out LN gamma / beta
                ],
                out_specs=row_spec,
            ),
            compiler_params=cparams,
            cost_estimate=cost,
        )

    args = (hs2, in2, params["w_down"], w_cat, pa, ph)
    try:
        out = build(fused_kernel, single_buffer=True)(*args)
    except Exception:
        # Older Mosaic without single-buffered residents / minor-dim concat: same math,
        # two MXU passes, default double-buffering (previously validated structure).
        out = build(unfused_kernel, single_buffer=False)(*args)
    return out.reshape(B, S, H)


def make_params(key, hidden_size, adapter_size, init_range=0.02, dtype=jnp.float32):
    """Weights stored as [in, out] (torch weight transposed). Use dtype=bf16 in production."""
    ks = jax.random.split(key, 3)
    w_down = (jax.random.normal(ks[0], (hidden_size, adapter_size)) * init_range).astype(dtype)
    w_up = (jax.random.normal(ks[1], (adapter_size, hidden_size)) * init_range).astype(dtype)
    w_dense = (jax.random.normal(ks[2], (hidden_size, hidden_size)) * 0.02).astype(dtype)
    return {
        "w_down": w_down,
        "b_down": jnp.zeros((1, adapter_size), dtype),
        "g_dln": jnp.ones((1, adapter_size), dtype),
        "b_dln": jnp.zeros((1, adapter_size), dtype),
        "w_up": w_up,
        "b_up": jnp.zeros((1, hidden_size), dtype),
        "w_dense": w_dense,
        "b_dense": jnp.zeros((1, hidden_size), dtype),
        "g_out": jnp.ones((1, hidden_size), dtype),
        "b_out": jnp.zeros((1, hidden_size), dtype),
    }


def reference(hidden_states, input_tensor, params):
    x = input_tensor.astype(jnp.float32)
    hs = hidden_states.astype(jnp.float32)

    def ln(v, g, b):
        mu = jnp.mean(v, -1, keepdims=True)
        var = jnp.mean((v - mu) ** 2, -1, keepdims=True)
        return (v - mu) / jnp.sqrt(var + LN_EPS) * g + b

    down = ln(x @ params["w_down"].astype(jnp.float32) + params["b_down"],
              params["g_dln"], params["b_dln"])
    adapter_out = x + down @ params["w_up"].astype(jnp.float32) + params["b_up"]
    dense = hs @ params["w_dense"].astype(jnp.float32) + params["b_dense"]
    return ln(dense + adapter_out + x, params["g_out"], params["b_out"])


if __name__ == "__main__":
    batch, seq, hidden, adapter = 2, 8, 128, 64

    key = jax.random.PRNGKey(0)
    k_hs, k_in, k_p = jax.random.split(key, 3)
    hidden_states = jax.random.normal(k_hs, (batch, seq, hidden), jnp.float32)
    input_tensor = jax.random.normal(k_in, (batch, seq, hidden), jnp.float32)
    params = make_params(k_p, hidden, adapter)

    out = bert_adapted_self_output(hidden_states, input_tensor, params)
    jax.block_until_ready(out)

    ref = reference(hidden_states, input_tensor, params)
    assert out.shape == (batch, seq, hidden)
    assert jnp.allclose(out, ref, atol=1e-4, rtol=1e-4), float(jnp.max(jnp.abs(out - ref)))

    print("KERNEL_OK")
</pallas_src>

<mosaic_0001>
module attributes {stable_mosaic.version = 11 : i64} {
  func.func @fused_kernel(%arg0: i32, %arg1: memref<8x128xf32, #tpu.memory_space<vmem>>, %arg2: memref<8x128xf32, #tpu.memory_space<vmem>>, %arg3: memref<128x64xf32, #tpu.memory_space<vmem>>, %arg4: memref<192x128xf32, #tpu.memory_space<vmem>>, %arg5: memref<3x64xf32, #tpu.memory_space<vmem>>, %arg6: memref<3x128xf32, #tpu.memory_space<vmem>>, %arg7: memref<8x128xf32, #tpu.memory_space<vmem>>) attributes {dimension_semantics = [#tpu.dimension_semantics<parallel>], iteration_bounds = array<i64: 2>, scalar_prefetch = 0 : i64, scratch_operands = 0 : i64, tpu.core_type = #tpu.core_type<tc>, window_params = [{transform_indices = @transform_0, window_bounds = array<i64: 8, 128>}, {transform_indices = @transform_1, window_bounds = array<i64: 8, 128>}, {pipeline_mode = #tpu.pipeline_mode<synchronous>, transform_indices = @transform_2, window_bounds = array<i64: 128, 64>}, {pipeline_mode = #tpu.pipeline_mode<synchronous>, transform_indices = @transform_3, window_bounds = array<i64: 192, 128>}, {pipeline_mode = #tpu.pipeline_mode<synchronous>, transform_indices = @transform_4, window_bounds = array<i64: 3, 64>}, {pipeline_mode = #tpu.pipeline_mode<synchronous>, transform_indices = @transform_5, window_bounds = array<i64: 3, 128>}, {transform_indices = @transform_6, window_bounds = array<i64: 8, 128>}]} {
    %c0 = arith.constant 0 : index
    %c0_0 = arith.constant 0 : index
    %0 = vector.load %arg2[%c0, %c0_0] : memref<8x128xf32, #tpu.memory_space<vmem>>, vector<8x128xf32>
    %c0_1 = arith.constant 0 : index
    %c0_2 = arith.constant 0 : index
    %1 = vector.load %arg3[%c0_1, %c0_2] : memref<128x64xf32, #tpu.memory_space<vmem>>, vector<128x64xf32>
    %cst = arith.constant dense<0.000000e+00> : vector<8x64xf32>
    %2 = tpu.matmul %0, %1, %cst {dimension_numbers = #tpu.dot_dimension_numbers<[1], [0], [0], [1], [0, 0, 1, 1], [], []>} : vector<8x128xf32>, vector<128x64xf32>, vector<8x64xf32> -> vector<8x64xf32>
    %c0_3 = arith.constant 0 : index
    %c0_4 = arith.constant 0 : index
    %3 = vector.load %arg5[%c0_3, %c0_4] : memref<3x64xf32, #tpu.memory_space<vmem>>, vector<1x64xf32>
    %4 = vector.broadcast %3 : vector<1x64xf32> to vector<8x64xf32>
    %5 = arith.addf %2, %4 : vector<8x64xf32>
    %c1 = arith.constant 1 : index
    %c0_5 = arith.constant 0 : index
    %6 = vector.load %arg5[%c1, %c0_5] : memref<3x64xf32, #tpu.memory_space<vmem>>, vector<1x64xf32>
    %c2 = arith.constant 2 : index
    %c0_6 = arith.constant 0 : index
    %7 = vector.load %arg5[%c2, %c0_6] : memref<3x64xf32, #tpu.memory_space<vmem>>, vector<1x64xf32>
    %cst_7 = arith.constant dense<0.000000e+00> : vector<8xf32>
    %8 = vector.multi_reduction <add>, %5, %cst_7 [1] : vector<8x64xf32> to vector<8xf32>
    %9 = vector.shape_cast %8 : vector<8xf32> to vector<8x1xf32>
    %cst_8 = arith.constant 6.400000e+01 : f32
    %10 = vector.broadcast %cst_8 : f32 to vector<8x1xf32>
    %11 = arith.divf %9, %10 : vector<8x1xf32>
    %12 = vector.broadcast %11 : vector<8x1xf32> to vector<8x64xf32>
    %13 = arith.subf %5, %12 : vector<8x64xf32>
    %14 = arith.mulf %13, %13 : vector<8x64xf32>
    %cst_9 = arith.constant dense<0.000000e+00> : vector<8xf32>
    %15 = vector.multi_reduction <add>, %14, %cst_9 [1] : vector<8x64xf32> to vector<8xf32>
    %16 = vector.shape_cast %15 : vector<8xf32> to vector<8x1xf32>
    %cst_10 = arith.constant 6.400000e+01 : f32
    %17 = vector.broadcast %cst_10 : f32 to vector<8x1xf32>
    %18 = arith.divf %16, %17 : vector<8x1xf32>
    %cst_11 = arith.constant 9.99999996E-13 : f32
    %19 = vector.broadcast %cst_11 : f32 to vector<8x1xf32>
    %20 = arith.addf %18, %19 : vector<8x1xf32>
    %21 = math.rsqrt %20 : vector<8x1xf32>
    %22 = vector.broadcast %21 : vector<8x1xf32> to vector<8x64xf32>
    %23 = arith.mulf %13, %22 : vector<8x64xf32>
    %24 = vector.broadcast %6 : vector<1x64xf32> to vector<8x64xf32>
    %25 = arith.mulf %23, %24 : vector<8x64xf32>
    %26 = vector.broadcast %7 : vector<1x64xf32> to vector<8x64xf32>
    %27 = arith.addf %25, %26 : vector<8x64xf32>
    %c0_12 = arith.constant 0 : index
    %c0_13 = arith.constant 0 : index
    %28 = vector.load %arg1[%c0_12, %c0_13] : memref<8x128xf32, #tpu.memory_space<vmem>>, vector<8x128xf32>
    %29 = tpu.concatenate %28, %27 in 1 : vector<8x128xf32>, vector<8x64xf32> -> vector<8x192xf32>
    %c0_14 = arith.constant 0 : index
    %c0_15 = arith.constant 0 : index
    %30 = vector.load %arg4[%c0_14, %c0_15] : memref<192x128xf32, #tpu.memory_space<vmem>>, vector<192x128xf32>
    %cst_16 = arith.constant dense<0.000000e+00> : vector<8x128xf32>
    %31 = tpu.matmul %29, %30, %cst_16 {dimension_numbers = #tpu.dot_dimension_numbers<[1], [0], [0], [1], [0, 0, 1, 1], [], []>} : vector<8x192xf32>, vector<192x128xf32>, vector<8x128xf32> -> vector<8x128xf32>
    %c0_17 = arith.constant 0 : index
    %c0_18 = arith.constant 0 : index
    %32 = vector.load %arg6[%c0_17, %c0_18] : memref<3x128xf32, #tpu.memory_space<vmem>>, vector<1x128xf32>
    %33 = vector.broadcast %32 : vector<1x128xf32> to vector<8x128xf32>
    %34 = arith.addf %31, %33 : vector<8x128xf32>
    %cst_19 = arith.constant 2.000000e+00 : f32
    %35 = vector.broadcast %cst_19 : f32 to vector<8x128xf32>
    %36 = arith.mulf %35, %0 : vector<8x128xf32>
    %37 = arith.addf %34, %36 : vector<8x128xf32>
    %c1_20 = arith.constant 1 : index
    %c0_21 = arith.constant 0 : index
    %38 = vector.load %arg6[%c1_20, %c0_21] : memref<3x128xf32, #tpu.memory_space<vmem>>, vector<1x128xf32>
    %c2_22 = arith.constant 2 : index
    %c0_23 = arith.constant 0 : index
    %39 = vector.load %arg6[%c2_22, %c0_23] : memref<3x128xf32, #tpu.memory_space<vmem>>, vector<1x128xf32>
    %cst_24 = arith.constant dense<0.000000e+00> : vector<8xf32>
    %40 = vector.multi_reduction <add>, %37, %cst_24 [1] : vector<8x128xf32> to vector<8xf32>
    %41 = vector.shape_cast %40 : vector<8xf32> to vector<8x1xf32>
    %cst_25 = arith.constant 1.280000e+02 : f32
    %42 = vector.broadcast %cst_25 : f32 to vector<8x1xf32>
    %43 = arith.divf %41, %42 : vector<8x1xf32>
    %44 = vector.broadcast %43 : vector<8x1xf32> to vector<8x128xf32>
    %45 = arith.subf %37, %44 : vector<8x128xf32>
    %46 = arith.mulf %45, %45 : vector<8x128xf32>
    %cst_26 = arith.constant dense<0.000000e+00> : vector<8xf32>
    %47 = vector.multi_reduction <add>, %46, %cst_26 [1] : vector<8x128xf32> to vector<8xf32>
    %48 = vector.shape_cast %47 : vector<8xf32> to vector<8x1xf32>
    %cst_27 = arith.constant 1.280000e+02 : f32
    %49 = vector.broadcast %cst_27 : f32 to vector<8x1xf32>
    %50 = arith.divf %48, %49 : vector<8x1xf32>
    %cst_28 = arith.constant 9.99999996E-13 : f32
    %51 = vector.broadcast %cst_28 : f32 to vector<8x1xf32>
    %52 = arith.addf %50, %51 : vector<8x1xf32>
    %53 = math.rsqrt %52 : vector<8x1xf32>
    %54 = vector.broadcast %53 : vector<8x1xf32> to vector<8x128xf32>
    %55 = arith.mulf %45, %54 : vector<8x128xf32>
    %56 = vector.broadcast %38 : vector<1x128xf32> to vector<8x128xf32>
    %57 = arith.mulf %55, %56 : vector<8x128xf32>
    %58 = vector.broadcast %39 : vector<1x128xf32> to vector<8x128xf32>
    %59 = arith.addf %57, %58 : vector<8x128xf32>
    %c0_29 = arith.constant 0 : index
    %c0_30 = arith.constant 0 : index
    %60 = vector.load %arg7[%c0_29, %c0_30] : memref<8x128xf32, #tpu.memory_space<vmem>>, vector<8x128xf32>
    tpu.vector_store %arg7[%c0_29, %c0_30], %59 {strides = array<i32>} : memref<8x128xf32, #tpu.memory_space<vmem>>, vector<8x128xf32>,
    return
  }
  func.func @transform_0(%arg0: i32) -> (i32, i32) {
    %c0_i32 = arith.constant 0 : i32
    %c0_i32_0 = arith.constant 0 : i32
    return %arg0, %c0_i32 : i32, i32
  }
  func.func @transform_1(%arg0: i32) -> (i32, i32) {
    %c0_i32 = arith.constant 0 : i32
    %c0_i32_0 = arith.constant 0 : i32
    return %arg0, %c0_i32 : i32, i32
  }
  func.func @transform_2(%arg0: i32) -> (i32, i32) {
    %c0_i32 = arith.constant 0 : i32
    %c0_i32_0 = arith.constant 0 : i32
    %c0_i32_1 = arith.constant 0 : i32
    return %c0_i32, %c0_i32_0 : i32, i32
  }
  func.func @transform_3(%arg0: i32) -> (i32, i32) {
    %c0_i32 = arith.constant 0 : i32
    %c0_i32_0 = arith.constant 0 : i32
    %c0_i32_1 = arith.constant 0 : i32
    return %c0_i32, %c0_i32_0 : i32, i32
  }
  func.func @transform_4(%arg0: i32) -> (i32, i32) {
    %c0_i32 = arith.constant 0 : i32
    %c0_i32_0 = arith.constant 0 : i32
    %c0_i32_1 = arith.constant 0 : i32
    return %c0_i32, %c0_i32_0 : i32, i32
  }
  func.func @transform_5(%arg0: i32) -> (i32, i32) {
    %c0_i32 = arith.constant 0 : i32
    %c0_i32_0 = arith.constant 0 : i32
    %c0_i32_1 = arith.constant 0 : i32
    return %c0_i32, %c0_i32_0 : i32, i32
  }
  func.func @transform_6(%arg0: i32) -> (i32, i32) {
    %c0_i32 = arith.constant 0 : i32
    %c0_i32_0 = arith.constant 0 : i32
    return %arg0, %c0_i32 : i32, i32
  }
}

module attributes {stable_mosaic.version = 11 : i64} {
  func.func @unfused_kernel(%arg0: i32, %arg1: memref<8x128xf32, #tpu.memory_space<vmem>>, %arg2: memref<8x128xf32, #tpu.memory_space<vmem>>, %arg3: memref<128x64xf32, #tpu.memory_space<vmem>>, %arg4: memref<192x128xf32, #tpu.memory_space<vmem>>, %arg5: memref<3x64xf32, #tpu.memory_space<vmem>>, %arg6: memref<3x128xf32, #tpu.memory_space<vmem>>, %arg7: memref<8x128xf32, #tpu.memory_space<vmem>>) attributes {dimension_semantics = [#tpu.dimension_semantics<parallel>], iteration_bounds = array<i64: 2>, scalar_prefetch = 0 : i64, scratch_operands = 0 : i64, tpu.core_type = #tpu.core_type<tc>, window_params = [{transform_indices = @transform_0, window_bounds = array<i64: 8, 128>}, {transform_indices = @transform_1, window_bounds = array<i64: 8, 128>}, {pipeline_mode = #tpu.pipeline_mode<synchronous>, transform_indices = @transform_2, window_bounds = array<i64: 128, 64>}, {pipeline_mode = #tpu.pipeline_mode<synchronous>, transform_indices = @transform_3, window_bounds = array<i64: 192, 128>}, {pipeline_mode = #tpu.pipeline_mode<synchronous>, transform_indices = @transform_4, window_bounds = array<i64: 3, 64>}, {pipeline_mode = #tpu.pipeline_mode<synchronous>, transform_indices = @transform_5, window_bounds = array<i64: 3, 128>}, {transform_indices = @transform_6, window_bounds = array<i64: 8, 128>}]} {
    %c0 = arith.constant 0 : index
    %c0_0 = arith.constant 0 : index
    %0 = vector.load %arg2[%c0, %c0_0] : memref<8x128xf32, #tpu.memory_space<vmem>>, vector<8x128xf32>
    %c0_1 = arith.constant 0 : index
    %c0_2 = arith.constant 0 : index
    %1 = vector.load %arg3[%c0_1, %c0_2] : memref<128x64xf32, #tpu.memory_space<vmem>>, vector<128x64xf32>
    %cst = arith.constant dense<0.000000e+00> : vector<8x64xf32>
    %2 = tpu.matmul %0, %1, %cst {dimension_numbers = #tpu.dot_dimension_numbers<[1], [0], [0], [1], [0, 0, 1, 1], [], []>} : vector<8x128xf32>, vector<128x64xf32>, vector<8x64xf32> -> vector<8x64xf32>
    %c0_3 = arith.constant 0 : index
    %c0_4 = arith.constant 0 : index
    %3 = vector.load %arg5[%c0_3, %c0_4] : memref<3x64xf32, #tpu.memory_space<vmem>>, vector<1x64xf32>
    %4 = vector.broadcast %3 : vector<1x64xf32> to vector<8x64xf32>
    %5 = arith.addf %2, %4 : vector<8x64xf32>
    %c1 = arith.constant 1 : index
    %c0_5 = arith.constant 0 : index
    %6 = vector.load %arg5[%c1, %c0_5] : memref<3x64xf32, #tpu.memory_space<vmem>>, vector<1x64xf32>
    %c2 = arith.constant 2 : index
    %c0_6 = arith.constant 0 : index
    %7 = vector.load %arg5[%c2, %c0_6] : memref<3x64xf32, #tpu.memory_space<vmem>>, vector<1x64xf32>
    %cst_7 = arith.constant dense<0.000000e+00> : vector<8xf32>
    %8 = vector.multi_reduction <add>, %5, %cst_7 [1] : vector<8x64xf32> to vector<8xf32>
    %9 = vector.shape_cast %8 : vector<8xf32> to vector<8x1xf32>
    %cst_8 = arith.constant 6.400000e+01 : f32
    %10 = vector.broadcast %cst_8 : f32 to vector<8x1xf32>
    %11 = arith.divf %9, %10 : vector<8x1xf32>
    %12 = vector.broadcast %11 : vector<8x1xf32> to vector<8x64xf32>
    %13 = arith.subf %5, %12 : vector<8x64xf32>
    %14 = arith.mulf %13, %13 : vector<8x64xf32>
    %cst_9 = arith.constant dense<0.000000e+00> : vector<8xf32>
    %15 = vector.multi_reduction <add>, %14, %cst_9 [1] : vector<8x64xf32> to vector<8xf32>
    %16 = vector.shape_cast %15 : vector<8xf32> to vector<8x1xf32>
    %cst_10 = arith.constant 6.400000e+01 : f32
    %17 = vector.broadcast %cst_10 : f32 to vector<8x1xf32>
    %18 = arith.divf %16, %17 : vector<8x1xf32>
    %cst_11 = arith.constant 9.99999996E-13 : f32
    %19 = vector.broadcast %cst_11 : f32 to vector<8x1xf32>
    %20 = arith.addf %18, %19 : vector<8x1xf32>
    %21 = math.rsqrt %20 : vector<8x1xf32>
    %22 = vector.broadcast %21 : vector<8x1xf32> to vector<8x64xf32>
    %23 = arith.mulf %13, %22 : vector<8x64xf32>
    %24 = vector.broadcast %6 : vector<1x64xf32> to vector<8x64xf32>
    %25 = arith.mulf %23, %24 : vector<8x64xf32>
    %26 = vector.broadcast %7 : vector<1x64xf32> to vector<8x64xf32>
    %27 = arith.addf %25, %26 : vector<8x64xf32>
    %c0_12 = arith.constant 0 : index
    %c0_13 = arith.constant 0 : index
    %28 = vector.load %arg1[%c0_12, %c0_13] : memref<8x128xf32, #tpu.memory_space<vmem>>, vector<8x128xf32>
    %c0_14 = arith.constant 0 : index
    %c0_15 = arith.constant 0 : index
    %29 = vector.load %arg4[%c0_14, %c0_15] : memref<192x128xf32, #tpu.memory_space<vmem>>, vector<128x128xf32>
    %cst_16 = arith.constant dense<0.000000e+00> : vector<8x128xf32>
    %30 = tpu.matmul %28, %29, %cst_16 {dimension_numbers = #tpu.dot_dimension_numbers<[1], [0], [0], [1], [0, 0, 1, 1], [], []>} : vector<8x128xf32>, vector<128x128xf32>, vector<8x128xf32> -> vector<8x128xf32>
    %c128 = arith.constant 128 : index
    %c0_17 = arith.constant 0 : index
    %31 = vector.load %arg4[%c128, %c0_17] : memref<192x128xf32, #tpu.memory_space<vmem>>, vector<64x128xf32>
    %cst_18 = arith.constant dense<0.000000e+00> : vector<8x128xf32>
    %32 = tpu.matmul %27, %31, %cst_18 {dimension_numbers = #tpu.dot_dimension_numbers<[1], [0], [0], [1], [0, 0, 1, 1], [], []>} : vector<8x64xf32>, vector<64x128xf32>, vector<8x128xf32> -> vector<8x128xf32>
    %33 = arith.addf %30, %32 : vector<8x128xf32>
    %c0_19 = arith.constant 0 : index
    %c0_20 = arith.constant 0 : index
    %34 = vector.load %arg6[%c0_19, %c0_20] : memref<3x128xf32, #tpu.memory_space<vmem>>, vector<1x128xf32>
    %35 = vector.broadcast %34 : vector<1x128xf32> to vector<8x128xf32>
    %36 = arith.addf %33, %35 : vector<8x128xf32>
    %cst_21 = arith.constant 2.000000e+00 : f32
    %37 = vector.broadcast %cst_21 : f32 to vector<8x128xf32>
    %38 = arith.mulf %37, %0 : vector<8x128xf32>
    %39 = arith.addf %36, %38 : vector<8x128xf32>
    %c1_22 = arith.constant 1 : index
    %c0_23 = arith.constant 0 : index
    %40 = vector.load %arg6[%c1_22, %c0_23] : memref<3x128xf32, #tpu.memory_space<vmem>>, vector<1x128xf32>
    %c2_24 = arith.constant 2 : index
    %c0_25 = arith.constant 0 : index
    %41 = vector.load %arg6[%c2_24, %c0_25] : memref<3x128xf32, #tpu.memory_space<vmem>>, vector<1x128xf32>
    %cst_26 = arith.constant dense<0.000000e+00> : vector<8xf32>
    %42 = vector.multi_reduction <add>, %39, %cst_26 [1] : vector<8x128xf32> to vector<8xf32>
    %43 = vector.shape_cast %42 : vector<8xf32> to vector<8x1xf32>
    %cst_27 = arith.constant 1.280000e+02 : f32
    %44 = vector.broadcast %cst_27 : f32 to vector<8x1xf32>
    %45 = arith.divf %43, %44 : vector<8x1xf32>
    %46 = vector.broadcast %45 : vector<8x1xf32> to vector<8x128xf32>
    %47 = arith.subf %39, %46 : vector<8x128xf32>
    %48 = arith.mulf %47, %47 : vector<8x128xf32>
    %cst_28 = arith.constant dense<0.000000e+00> : vector<8xf32>
    %49 = vector.multi_reduction <add>, %48, %cst_28 [1] : vector<8x128xf32> to vector<8xf32>
    %50 = vector.shape_cast %49 : vector<8xf32> to vector<8x1xf32>
    %cst_29 = arith.constant 1.280000e+02 : f32
    %51 = vector.broadcast %cst_29 : f32 to vector<8x1xf32>
    %52 = arith.divf %50, %51 : vector<8x1xf32>
    %cst_30 = arith.constant 9.99999996E-13 : f32
    %53 = vector.broadcast %cst_30 : f32 to vector<8x1xf32>
    %54 = arith.addf %52, %53 : vector<8x1xf32>
    %55 = math.rsqrt %54 : vector<8x1xf32>
    %56 = vector.broadcast %55 : vector<8x1xf32> to vector<8x128xf32>
    %57 = arith.mulf %47, %56 : vector<8x128xf32>
    %58 = vector.broadcast %40 : vector<1x128xf32> to vector<8x128xf32>
    %59 = arith.mulf %57, %58 : vector<8x128xf32>
    %60 = vector.broadcast %41 : vector<1x128xf32> to vector<8x128xf32>
    %61 = arith.addf %59, %60 : vector<8x128xf32>
    %c0_31 = arith.constant 0 : index
    %c0_32 = arith.constant 0 : index
    %62 = vector.load %arg7[%c0_31, %c0_32] : memref<8x128xf32, #tpu.memory_space<vmem>>, vector<8x128xf32>
    tpu.vector_store %arg7[%c0_31, %c0_32], %61 {strides = array<i32>} : memref<8x128xf32, #tpu.memory_space<vmem>>, vector<8x128xf32>,
    return
  }
  func.func @transform_0(%arg0: i32) -> (i32, i32) {
    %c0_i32 = arith.constant 0 : i32
    %c0_i32_0 = arith.constant 0 : i32
    return %arg0, %c0_i32 : i32, i32
  }
  func.func @transform_1(%arg0: i32) -> (i32, i32) {
    %c0_i32 = arith.constant 0 : i32
    %c0_i32_0 = arith.constant 0 : i32
    return %arg0, %c0_i32 : i32, i32
  }
  func.func @transform_2(%arg0: i32) -> (i32, i32) {
    %c0_i32 = arith.constant 0 : i32
    %c0_i32_0 = arith.constant 0 : i32
    %c0_i32_1 = arith.constant 0 : i32
    return %c0_i32, %c0_i32_0 : i32, i32
  }
  func.func @transform_3(%arg0: i32) -> (i32, i32) {
    %c0_i32 = arith.constant 0 : i32
    %c0_i32_0 = arith.constant 0 : i32
    %c0_i32_1 = arith.constant 0 : i32
    return %c0_i32, %c0_i32_0 : i32, i32
  }
  func.func @transform_4(%arg0: i32) -> (i32, i32) {
    %c0_i32 = arith.constant 0 : i32
    %c0_i32_0 = arith.constant 0 : i32
    %c0_i32_1 = arith.constant 0 : i32
    return %c0_i32, %c0_i32_0 : i32, i32
  }
  func.func @transform_5(%arg0: i32) -> (i32, i32) {
    %c0_i32 = arith.constant 0 : i32
    %c0_i32_0 = arith.constant 0 : i32
    %c0_i32_1 = arith.constant 0 : i32
    return %c0_i32, %c0_i32_0 : i32, i32
  }
  func.func @transform_6(%arg0: i32) -> (i32, i32) {
    %c0_i32 = arith.constant 0 : i32
    %c0_i32_0 = arith.constant 0 : i32
    return %arg0, %c0_i32 : i32, i32
  }
}

</mosaic_0001>

<llo_original>
// kernel: tpu_custom_call.1
$region0: #{tpu_custom_call.1}
  #allocation0 [shape = 'u32[]', space=smem, size = 0x4, offset = 0x4, fixed_abs, tag = 'smem constant byte address 0x4 - core index']
  #allocation1 [shape = 'u32[144,128]{1,0:T(1,128)}', space=vmem, size = 0x12000, scoped, tag = 'internal scratch']
  %s0 = inlined_call_operand.hbm [shape: f32[16,128], index: 0, kind: input, shape index: {}]
  %s1 = inlined_call_operand.hbm [shape: f32[16,128], index: 1, kind: input, shape index: {}]
  %s2 = inlined_call_operand.vmem [shape: f32[128,64], index: 2, kind: input, shape index: {}]
  %s3 = inlined_call_operand.vmem [shape: f32[192,128], index: 3, kind: input, shape index: {}]
  %s4 = inlined_call_operand.vmem [shape: f32[3,64], index: 4, kind: input, shape index: {}]
  %s5 = inlined_call_operand.vmem [shape: f32[3,128], index: 5, kind: input, shape index: {}]
  %s6 = inlined_call_operand.hbm [shape: f32[16,128], index: 6, kind: output, shape index: {}]
  %s7 = sld [smem:[#allocation0]]
  $region65: #{tpu_custom_call.1} parent=0
    _
  %s9 = ssub.s32 1, %s7
  %s10 = scalar_select 0, %s9, %s7
  $region1: #{tpu_custom_call.1} parent=0
    #allocation2 [shape = 'u8[8192]{0}', space=vmem, size = 0x2000, scoped, tag = 'input window, operand 0']
    #allocation3 [shape = 's32[2]{0}', space=sflag, size = 0x8, scoped, tag = 'scoped memory for tpu_custom_call.1']
    #allocation4 [shape = 's32[2]{0}', space=sflag, size = 0x8, scoped, tag = 'scoped memory for tpu_custom_call.1']
    #allocation5 [shape = 'u8[8192]{0}', space=vmem, size = 0x2000, scoped, tag = 'input window, operand 1']
    #allocation6 [shape = 's32[2]{0}', space=sflag, size = 0x8, scoped, tag = 'scoped memory for tpu_custom_call.1']
    #allocation7 [shape = 'u8[8192]{0}', space=vmem, size = 0x2000, scoped, tag = 'output window, operand 0']
    %11 = vsyncpa [#allocation3], 0
    %s12 = scalar_lea.sflag [#allocation3], 1
    %13 = vsyncpa %s12, 0
    %14 = vsyncpa [#allocation6], 0
    %s15 = scalar_lea.sflag [#allocation6], 1
    %16 = vsyncpa %s15, 0
    %17 = vsyncpa [#allocation4], 0
    %s18 = scalar_lea.sflag [#allocation4], 1
    %19 = vsyncpa %s18, 0
    loop: start=0, step=1, limit=4
    $region2: #{tpu_custom_call.1} parent=1 // loop_pre_header
      _
    $region3: #{tpu_custom_call.1} parent=1 // loop_header
      %s21 = sphi 0, %s25
      %p22 = scmp.ge.s32.totalorder %s21, 4
      %s31 = sphi 0, %s33
      %s34 = sphi 0, %s31
      %s35 = sphi 0, %s34
      %s51 = sphi 0, %s35
      %s57 = sphi 0, %s59
      %s60 = sphi 0, %s57
      %s61 = sphi 0, %s60
      %s77 = sphi 0, %s61
      %s81 = sphi 0, %s81
      %s83 = sphi 0, %s81
      %s84 = sphi 0, %s83
      %s98 = sphi 0, %s84
      %s102 = sphi 0, %s102
      %s104 = sphi 0, %s102
      %s105 = sphi 0, %s104
      %s119 = sphi 0, %s105
      %s123 = sphi 0, %s123
      %s125 = sphi 0, %s123
      %s126 = sphi 0, %s125
      %s140 = sphi 0, %s126
      %s144 = sphi 0, %s144
      %s146 = sphi 0, %s144
      %s147 = sphi 0, %s146
      %s161 = sphi 0, %s147
      %s167 = sphi 0, %s169
      %s170 = sphi 0, %s167
      %s171 = sphi 0, %s170
      %s187 = sphi 0, %s171
    $region4: #{tpu_custom_call.1} parent=1 // loop_header_branch
      %24 = sbr.rel (%p22) target = $region8
    $region5: #{tpu_custom_call.1} parent=1 // loop_body
      %s26 = ssub.s32 %s21, 1
      %s27 = ssub.s32 %s21, 2
      %s28 = sadd.s32 %s21, 1
      %s29 = ssub.s32 %s21, %s28
      %p30 = scmp.eq.s32.totalorder %s29, 0
      %s32 = sadd.s32 %s31, 1
      %s33 = scalar_select %p30, %s31, %s32
      %p36 = pneg %p30
      %p37 = scmp.eq.s32.totalorder %s21, 1
      %p38 = por %p36, %p37
      %p39 = scmp.ne.s32.totalorder %s31, %s34
      %p40 = scmp.eq.s32.totalorder %s21, 0
      %p41 = por %p39, %p40
      %p42 = scmp.ne.s32.totalorder %s31, %s34
      %p43 = scmp.eq.s32.totalorder %s26, 1
      %p44 = por %p42, %p43
      %p45 = scmp.ne.s32.totalorder %s34, %s35
      %p46 = scmp.eq.s32.totalorder %s26, 0
      %p47 = por %p45, %p46
      %p48 = scmp.ne.s32.totalorder %s34, %s35
      %p49 = scmp.eq.s32.totalorder %s27, 1
      %p50 = por %p48, %p49
      %p52 = scmp.ne.s32.totalorder %s35, %s51
      %p53 = scmp.eq.s32.totalorder %s27, 0
      %p54 = por %p52, %p53
      %s55 = ssub.s32 %s21, %s28
      %p56 = scmp.eq.s32.totalorder %s55, 0
      %s58 = sadd.s32 %s57, 1
      %s59 = scalar_select %p56, %s57, %s58
      %p62 = pneg %p56
      %p63 = scmp.eq.s32.totalorder %s21, 1
      %p64 = por %p62, %p63
      %p65 = scmp.ne.s32.totalorder %s57, %s60
      %p66 = scmp.eq.s32.totalorder %s21, 0
      %p67 = por %p65, %p66
      %p68 = scmp.ne.s32.totalorder %s57, %s60
      %p69 = scmp.eq.s32.totalorder %s26, 1
      %p70 = por %p68, %p69
      %p71 = scmp.ne.s32.totalorder %s60, %s61
      %p72 = scmp.eq.s32.totalorder %s26, 0
      %p73 = por %p71, %p72
      %p74 = scmp.ne.s32.totalorder %s60, %s61
      %p75 = scmp.eq.s32.totalorder %s27, 1
      %p76 = por %p74, %p75
      %p78 = scmp.ne.s32.totalorder %s61, %s77
      %p79 = scmp.eq.s32.totalorder %s27, 0
      %p80 = por %p78, %p79
      %s82 = sadd.s32 %s81, 1
      %p85 = scmp.eq.s32.totalorder %s21, 1
      %p86 = scmp.ne.s32.totalorder %s81, %s83
      %p87 = scmp.eq.s32.totalorder %s21, 0
      %p88 = por %p86, %p87
      %p89 = scmp.ne.s32.totalorder %s81, %s83
      %p90 = scmp.eq.s32.totalorder %s26, 1
      %p91 = por %p89, %p90
      %p92 = scmp.ne.s32.totalorder %s83, %s84
      %p93 = scmp.eq.s32.totalorder %s26, 0
      %p94 = por %p92, %p93
      %p95 = scmp.ne.s32.totalorder %s83, %s84
      %p96 = scmp.eq.s32.totalorder %s27, 1
      %p97 = por %p95, %p96
      %p99 = scmp.ne.s32.totalorder %s84, %s98
      %p100 = scmp.eq.s32.totalorder %s27, 0
      %p101 = por %p99, %p100
      %s103 = sadd.s32 %s102, 1
      %p106 = scmp.eq.s32.totalorder %s21, 1
      %p107 = scmp.ne.s32.totalorder %s102, %s104
      %p108 = scmp.eq.s32.totalorder %s21, 0
      %p109 = por %p107, %p108
      %p110 = scmp.ne.s32.totalorder %s102, %s104
      %p111 = scmp.eq.s32.totalorder %s26, 1
      %p112 = por %p110, %p111
      %p113 = scmp.ne.s32.totalorder %s104, %s105
      %p114 = scmp.eq.s32.totalorder %s26, 0
      %p115 = por %p113, %p114
      %p116 = scmp.ne.s32.totalorder %s104, %s105
      %p117 = scmp.eq.s32.totalorder %s27, 1
      %p118 = por %p116, %p117
      %p120 = scmp.ne.s32.totalorder %s105, %s119
      %p121 = scmp.eq.s32.totalorder %s27, 0
      %p122 = por %p120, %p121
      %s124 = sadd.s32 %s123, 1
      %p127 = scmp.eq.s32.totalorder %s21, 1
      %p128 = scmp.ne.s32.totalorder %s123, %s125
      %p129 = scmp.eq.s32.totalorder %s21, 0
      %p130 = por %p128, %p129
      %p131 = scmp.ne.s32.totalorder %s123, %s125
      %p132 = scmp.eq.s32.totalorder %s26, 1
      %p133 = por %p131, %p132
      %p134 = scmp.ne.s32.totalorder %s125, %s126
      %p135 = scmp.eq.s32.totalorder %s26, 0
      %p136 = por %p134, %p135
      %p137 = scmp.ne.s32.totalorder %s125, %s126
      %p138 = scmp.eq.s32.totalorder %s27, 1
      %p139 = por %p137, %p138
      %p141 = scmp.ne.s32.totalorder %s126, %s140
      %p142 = scmp.eq.s32.totalorder %s27, 0
      %p143 = por %p141, %p142
      %s145 = sadd.s32 %s144, 1
      %p148 = scmp.eq.s32.totalorder %s21, 1
      %p149 = scmp.ne.s32.totalorder %s144, %s146
      %p150 = scmp.eq.s32.totalorder %s21, 0
      %p151 = por %p149, %p150
      %p152 = scmp.ne.s32.totalorder %s144, %s146
      %p153 = scmp.eq.s32.totalorder %s26, 1
      %p154 = por %p152, %p153
      %p155 = scmp.ne.s32.totalorder %s146, %s147
      %p156 = scmp.eq.s32.totalorder %s26, 0
      %p157 = por %p155, %p156
      %p158 = scmp.ne.s32.totalorder %s146, %s147
      %p159 = scmp.eq.s32.totalorder %s27, 1
      %p160 = por %p158, %p159
      %p162 = scmp.ne.s32.totalorder %s147, %s161
      %p163 = scmp.eq.s32.totalorder %s27, 0
      %p164 = por %p162, %p163
      %s165 = ssub.s32 %s21, %s28
      %p166 = scmp.eq.s32.totalorder %s165, 0
      %s168 = sadd.s32 %s167, 1
      %s169 = scalar_select %p166, %s167, %s168
      %p172 = pneg %p166
      %p173 = scmp.eq.s32.totalorder %s21, 1
      %p174 = por %p172, %p173
      %p175 = scmp.ne.s32.totalorder %s167, %s170
      %p176 = scmp.eq.s32.totalorder %s21, 0
      %p177 = por %p175, %p176
      %p178 = scmp.ne.s32.totalorder %s167, %s170
      %p179 = scmp.eq.s32.totalorder %s26, 1
      %p180 = por %p178, %p179
      %p181 = scmp.ne.s32.totalorder %s170, %s171
      %p182 = scmp.eq.s32.totalorder %s26, 0
      %p183 = por %p181, %p182
      %p184 = scmp.ne.s32.totalorder %s170, %s171
      %p185 = scmp.eq.s32.totalorder %s27, 1
      %p186 = por %p184, %p185
      %p188 = scmp.ne.s32.totalorder %s171, %s187
      %p189 = scmp.eq.s32.totalorder %s27, 0
      %p190 = por %p188, %p189
      %p191 = scmp.le.s32.totalorder 1, %s21
      %p192 = scmp.lt.s32.totalorder %s21, 3
      %p193 = pnand %p191, %p192
      %p194 = pneg %p193
      // Predicated region
      $region9: #{tpu_custom_call.1} parent=5 // pred_check
        _
      $region10: #{tpu_custom_call.1} parent=5 // pred_check_branch
        %196 = sbr.rel (%p193) target = $region12
      $region11: #{tpu_custom_call.1} parent=5 // pred_region
        %s197 = ssub.s32 %s21, 1
        // Predicated region
        $region13: #{tpu_custom_call.1} parent=11 // pred_check
          %p198 = pneg %p94
        $region14: #{tpu_custom_call.1} parent=11 // pred_check_branch
          %200 = sbr.rel (%p198) target = $region16
        $region15: #{tpu_custom_call.1} parent=11 // pred_region
          _
        $region16: #{tpu_custom_call.1} parent=11 // pred_fallthru
          _
        // Predicated region
        $region17: #{tpu_custom_call.1} parent=11 // pred_check
          %p201 = pneg %p115
        $region18: #{tpu_custom_call.1} parent=11 // pred_check_branch
          %203 = sbr.rel (%p201) target = $region20
        $region19: #{tpu_custom_call.1} parent=11 // pred_region
          _
        $region20: #{tpu_custom_call.1} parent=11 // pred_fallthru
          _
        // Predicated region
        $region21: #{tpu_custom_call.1} parent=11 // pred_check
          %p204 = pneg %p136
        $region22: #{tpu_custom_call.1} parent=11 // pred_check_branch
          %206 = sbr.rel (%p204) target = $region24
        $region23: #{tpu_custom_call.1} parent=11 // pred_region
          _
        $region24: #{tpu_custom_call.1} parent=11 // pred_fallthru
          _
        // Predicated region
        $region25: #{tpu_custom_call.1} parent=11 // pred_check
          %p207 = pneg %p157
        $region26: #{tpu_custom_call.1} parent=11 // pred_check_branch
          %209 = sbr.rel (%p207) target = $region28
        $region27: #{tpu_custom_call.1} parent=11 // pred_region
          _
        $region28: #{tpu_custom_call.1} parent=11 // pred_fallthru
          _
      $region12: #{tpu_custom_call.1} parent=5 // pred_fallthru
        _
      %p210 = scmp.lt.s32.totalorder %s21, 2
      // Predicated region
      $region29: #{tpu_custom_call.1} parent=5 // pred_check
        %p211 = pneg %p210
      $region30: #{tpu_custom_call.1} parent=5 // pred_check_branch
        %213 = sbr.rel (%p211) target = $region32
      $region31: #{tpu_custom_call.1} parent=5 // pred_region
        // Predicated region
        $region33: #{tpu_custom_call.1} parent=31 // pred_check
          %p214 = pneg %p41
        $region34: #{tpu_custom_call.1} parent=31 // pred_check_branch
          %216 = sbr.rel (%p214) target = $region36
        $region35: #{tpu_custom_call.1} parent=31 // pred_region
          %s217 = sand.u32 %s31, 1
          %s218 = scalar_lea.sflag [#allocation3], %s217
          %s219 = sand.u32 %s31, 1
          %s220 = smul.addr %s219, 8
          %s221 = scalar_lea.vmem [#allocation2], %s220
          %s223 = ssub.s32 128, 128
          %224 = vsyncadd %s218, %s223
          %s225 = smul.addr %s21, 128
          %s226 = scalar_lea.hbm %s0, %s225
          %s228 = sshll.u32 %s221, 4
          %s229 = int_to_ptr.vmem [resolvable:$true] %s228
          %231 = dma.hbm_to_vmem [thread:$0]  %s226, 128, %s229, %s218
        $region36: #{tpu_custom_call.1} parent=31 // pred_fallthru
          _
        // Predicated region
        $region37: #{tpu_custom_call.1} parent=31 // pred_check
          %p232 = pneg %p67
        $region38: #{tpu_custom_call.1} parent=31 // pred_check_branch
          %234 = sbr.rel (%p232) target = $region40
        $region39: #{tpu_custom_call.1} parent=31 // pred_region
          %s235 = sand.u32 %s57, 1
          %s236 = scalar_lea.sflag [#allocation6], %s235
          %s237 = sand.u32 %s57, 1
          %s238 = smul.addr %s237, 8
          %s239 = scalar_lea.vmem [#allocation5], %s238
          %s241 = ssub.s32 128, 128
          %242 = vsyncadd %s236, %s241
          %s243 = smul.addr %s21, 128
          %s244 = scalar_lea.hbm %s1, %s243
          %s246 = sshll.u32 %s239, 4
          %s247 = int_to_ptr.vmem [resolvable:$true] %s246
          %249 = dma.hbm_to_vmem [thread:$0]  %s244, 128, %s247, %s236
        $region40: #{tpu_custom_call.1} parent=31 // pred_fallthru
          _
      $region32: #{tpu_custom_call.1} parent=5 // pred_fallthru
        _
      %p250 = scmp.le.s32.totalorder 1, %s21
      %p251 = scmp.lt.s32.totalorder %s21, 3
      %p252 = pnand %p250, %p251
      %p253 = pneg %p252
      // Predicated region
      $region41: #{tpu_custom_call.1} parent=5 // pred_check
        _
      $region42: #{tpu_custom_call.1} parent=5 // pred_check_branch
        %255 = sbr.rel (%p252) target = $region44
      $region43: #{tpu_custom_call.1} parent=5 // pred_region
        %s256 = ssub.s32 %s21, 1
        %s257 = sand.u32 %s34, 1
        %s258 = scalar_lea.sflag [#allocation3], %s257
        %s259 = sand.u32 %s34, 1
        %s260 = smul.addr %s259, 8
        %s261 = scalar_lea.vmem [#allocation2], %s260
        // Predicated region
        $region45: #{tpu_custom_call.1} parent=43 // pred_check
          %p262 = pneg %p47
        $region46: #{tpu_custom_call.1} parent=43 // pred_check_branch
          %264 = sbr.rel (%p262) target = $region48
        $region47: #{tpu_custom_call.1} parent=43 // pred_region
          %265 = dma.done %s258, 128
        $region48: #{tpu_custom_call.1} parent=43 // pred_fallthru
          _
        %s266 = sand.u32 %s60, 1
        %s267 = scalar_lea.sflag [#allocation6], %s266
        %s268 = sand.u32 %s60, 1
        %s269 = smul.addr %s268, 8
        %s270 = scalar_lea.vmem [#allocation5], %s269
        // Predicated region
        $region49: #{tpu_custom_call.1} parent=43 // pred_check
          %p271 = pneg %p73
        $region50: #{tpu_custom_call.1} parent=43 // pred_check_branch
          %273 = sbr.rel (%p271) target = $region52
        $region51: #{tpu_custom_call.1} parent=43 // pred_region
          %274 = dma.done %s267, 128
        $region52: #{tpu_custom_call.1} parent=43 // pred_fallthru
          _
        %s275 = sand.u32 %s34, 1
        %s276 = scalar_lea.sflag [#allocation3], %s275
        %s277 = sand.u32 %s34, 1
        %s278 = smul.addr %s277, 8
        %s279 = scalar_lea.vmem [#allocation2], %s278
        %p280 = pneg %p47
        %p281 = pneg %p44
        %s282 = sand.u32 %s60, 1
        %s283 = scalar_lea.sflag [#allocation6], %s282
        %s284 = sand.u32 %s60, 1
        %s285 = smul.addr %s284, 8
        %s286 = scalar_lea.vmem [#allocation5], %s285
        %p287 = pneg %p73
        %p288 = pneg %p70
        %p289 = pneg %p94
        %p290 = pneg %p91
        %p291 = pneg %p115
        %p292 = pneg %p112
        %p293 = pneg %p136
        %p294 = pneg %p133
        %p295 = pneg %p157
        %p296 = pneg %p154
        %p297 = pneg %p183
        %p298 = pneg %p180
        %s299 = sand.u32 %s170, 1
        %s300 = scalar_lea.sflag [#allocation4], %s299
        %s301 = sand.u32 %s170, 1
        %s302 = smul.addr %s301, 8
        %s303 = scalar_lea.vmem [#allocation7], %s302
        %v304 = vld [vmem:[%s270] sm:$0xff]
        %v305 = vld [vmem:[%s2] sm:$0xff]
        %v306 = vld [vmem:[%s2 + $0x8] sm:$0xff]
        %v307 = vld [vmem:[%s2 + $0x10] sm:$0xff]
        %v308 = vld [vmem:[%s2 + $0x18] sm:$0xff]
        %v309 = vld [vmem:[%s2 + $0x20] sm:$0xff]
        %v310 = vld [vmem:[%s2 + $0x28] sm:$0xff]
        %v311 = vld [vmem:[%s2 + $0x30] sm:$0xff]
        %v312 = vld [vmem:[%s2 + $0x38] sm:$0xff]
        %v313 = vld [vmem:[%s2 + $0x40] sm:$0xff]
        %v314 = vld [vmem:[%s2 + $0x48] sm:$0xff]
        %v315 = vld [vmem:[%s2 + $0x50] sm:$0xff]
        %v316 = vld [vmem:[%s2 + $0x58] sm:$0xff]
        %v317 = vld [vmem:[%s2 + $0x60] sm:$0xff]
        %v318 = vld [vmem:[%s2 + $0x68] sm:$0xff]
        %v319 = vld [vmem:[%s2 + $0x70] sm:$0xff]
        %v320 = vld [vmem:[%s2 + $0x78] sm:$0xff]
        %v321 = vld [vmem:[%s4] sm:$0x1]
        %v322 = vlaneseq
        %v323 = vshrl.u32 %v322, 7
        %v324 = vsub.s32 0, %v323
        %v325 = vrot.slane %v321, %v324
        %326 = vmatprep.subr.mxu0 0.0
        %327 = vmatpush1.msra.mxu0 %v305
        %328 = vmatprep.subr.mxu0 0.0
        %329 = vmatpush1.msra.mxu0 %v306
        %330 = vmatprep.subr.mxu0 0.0
        %331 = vmatpush1.msra.mxu0 %v307
        %332 = vmatprep.subr.mxu0 0.0
        %333 = vmatpush1.msra.mxu0 %v308
        %334 = vmatprep.subr.mxu0 0.0
        %335 = vmatpush1.msra.mxu0 %v309
        %336 = vmatprep.subr.mxu0 0.0
        %337 = vmatpush1.msra.mxu0 %v310
        %338 = vmatprep.subr.mxu0 0.0
        %339 = vmatpush1.msra.mxu0 %v311
        %340 = vmatprep.subr.mxu0 0.0
        %341 = vmatpush1.msra.mxu0 %v312
        %342 = vmatprep.subr.mxu0 0.0
        %343 = vmatpush1.msra.mxu0 %v313
        %344 = vmatprep.subr.mxu0 0.0
        %345 = vmatpush1.msra.mxu0 %v314
        %346 = vmatprep.subr.mxu0 0.0
        %347 = vmatpush1.msra.mxu0 %v315
        %348 = vmatprep.subr.mxu0 0.0
        %349 = vmatpush1.msra.mxu0 %v316
        %350 = vmatprep.subr.mxu0 0.0
        %351 = vmatpush1.msra.mxu0 %v317
        %352 = vmatprep.subr.mxu0 0.0
        %353 = vmatpush1.msra.mxu0 %v318
        %354 = vmatprep.subr.mxu0 0.0
        %355 = vmatpush1.msra.mxu0 %v319
        %356 = vmatprep.subr.mxu0 0.0
        %357 = vmatpush1.msra.mxu0 %v320
        %358 = vmatprep.subr.mxu0 0.0
        %359 = vmatpush1.msra.mxu0 0.0
        %360 = vmatprep.subr.mxu0 0.0
        %361 = vmatpush1.msra.mxu0 0.0
        %362 = vmatprep.subr.mxu0 0.0
        %363 = vmatpush1.msra.mxu0 0.0
        %364 = vmatprep.subr.mxu0 0.0
        %365 = vmatpush1.msra.mxu0 0.0
        %366 = vmatprep.subr.mxu0 0.0
        %367 = vmatpush1.msra.mxu0 0.0
        %368 = vmatprep.subr.mxu0 0.0
        %369 = vmatpush1.msra.mxu0 0.0
        %370 = vmatprep.subr.mxu0 0.0
        %371 = vmatpush1.msra.mxu0 0.0
        %372 = vmatprep.subr.mxu0 0.0
        %373 = vmatpush1.msra.mxu0 0.0
        %374 = vmatprep.subr.mxu0 0.0
        %375 = vmatpush1.msra.mxu0 0.0
        %376 = vmatprep.subr.mxu0 0.0
        %377 = vmatpush1.msra.mxu0 0.0
        %378 = vmatprep.subr.mxu0 0.0
        %379 = vmatpush1.msra.mxu0 0.0
        %380 = vmatprep.subr.mxu0 0.0
        %381 = vmatpush1.msra.mxu0 0.0
        %382 = vmatprep.subr.mxu0 0.0
        %383 = vmatpush1.msra.mxu0 0.0
        %384 = vmatprep.subr.mxu0 0.0
        %385 = vmatpush1.msra.mxu0 0.0
        %386 = vmatprep.subr.mxu0 0.0
        %387 = vmatpush1.msra.mxu0 0.0
        %388 = vmatprep.subr.mxu0 0.0
        %389 = vmatpush1.msra.mxu0 0.0
        %390 = vmatprep.mubr.f32.mxu0 0.0
        %391 = vmatmul.mubr.f32.gmra.mrb[0].mxu0 %v304
        %v392 = vpop.f32.mrb[0].mxu0
        %v393 = vadd.f32 %v325, %v392
        %v394 = vpop.f32.mrb[0].mxu0
        %395 = vdwg.mxu0
        %v396 = vld [vmem:[%s4 + $0x1] sm:$0x1]
        %v397 = vld [vmem:[%s4 + $0x2] sm:$0x1]
        %vm398 = vcmask 523264
        %v399 = vsel %vm398, %v393, 0.0
        %400 = vadd.xlane.f32.xlu0 %v399
        %v401 = vpop.xlane.xlu0 %400
        %v402 = vrcp.pop 64.0
        %v403 = vmul.f32 %v401, %v402
        %v404 = vsub.f32 %v393, %v403
        %v405 = vmul.f32 %v404, %v404
        %v406 = vsel %vm398, %v405, 0.0
        %407 = vadd.xlane.f32.xlu0 %v406
        %v408 = vpop.xlane.xlu0 %407
        %v409 = vmul.f32 %v408, %v402
        %v410 = vadd.f32 %v409, 1e-12
        %v411 = vrsqrt.pop %v410
        %v412 = vmul.f32 %v404, %v411
        %v413 = vlaneseq
        %v414 = vshrl.u32 %v413, 7
        %v415 = vsub.s32 0, %v414
        %v416 = vrot.slane %v396, %v415
        %v417 = vmul.f32 %v412, %v416
        %v418 = vlaneseq
        %v419 = vshrl.u32 %v418, 7
        %v420 = vsub.s32 0, %v419
        %v421 = vrot.slane %v397, %v420
        %v422 = vadd.f32 %v417, %v421
        %v423 = vld [vmem:[%s261] sm:$0xff]
        %v424 = vld [vmem:[%s3] sm:$0xff]
        %v425 = vld [vmem:[%s3 + $0x8] sm:$0xff]
        %v426 = vld [vmem:[%s3 + $0x10] sm:$0xff]
        %v427 = vld [vmem:[%s3 + $0x18] sm:$0xff]
        %v428 = vld [vmem:[%s3 + $0x20] sm:$0xff]
        %v429 = vld [vmem:[%s3 + $0x28] sm:$0xff]
        %v430 = vld [vmem:[%s3 + $0x30] sm:$0xff]
        %v431 = vld [vmem:[%s3 + $0x38] sm:$0xff]
        %v432 = vld [vmem:[%s3 + $0x40] sm:$0xff]
        %v433 = vld [vmem:[%s3 + $0x48] sm:$0xff]
        %v434 = vld [vmem:[%s3 + $0x50] sm:$0xff]
        %v435 = vld [vmem:[%s3 + $0x58] sm:$0xff]
        %v436 = vld [vmem:[%s3 + $0x60] sm:$0xff]
        %v437 = vld [vmem:[%s3 + $0x68] sm:$0xff]
        %v438 = vld [vmem:[%s3 + $0x70] sm:$0xff]
        %v439 = vld [vmem:[%s3 + $0x78] sm:$0xff]
        %v440 = vld [vmem:[%s3 + $0x80] sm:$0xff]
        %v441 = vld [vmem:[%s3 + $0x88] sm:$0xff]
        %v442 = vld [vmem:[%s3 + $0x90] sm:$0xff]
        %v443 = vld [vmem:[%s3 + $0x98] sm:$0xff]
        %v444 = vld [vmem:[%s3 + $0xa0] sm:$0xff]
        %v445 = vld [vmem:[%s3 + $0xa8] sm:$0xff]
        %v446 = vld [vmem:[%s3 + $0xb0] sm:$0xff]
        %v447 = vld [vmem:[%s3 + $0xb8] sm:$0xff]
        %v448 = vld [vmem:[%s5] sm:$0x1]
        %v449 = vlaneseq
        %v450 = vshrl.u32 %v449, 7
        %v451 = vsub.s32 0, %v450
        %v452 = vrot.slane %v448, %v451
        %v454 = vsel %vm398, %v422, 0
        %456 = vmatprep.subr.mxu0 0.0
        %457 = vmatpush1.msra.mxu0 %v424
        %458 = vmatprep.subr.mxu0 0.0
        %459 = vmatpush1.msra.mxu0 %v425
        %460 = vmatprep.subr.mxu0 0.0
        %461 = vmatpush1.msra.mxu0 %v426
        %462 = vmatprep.subr.mxu0 0.0
        %463 = vmatpush1.msra.mxu0 %v427
        %464 = vmatprep.subr.mxu0 0.0
        %465 = vmatpush1.msra.mxu0 %v428
        %466 = vmatprep.subr.mxu0 0.0
        %467 = vmatpush1.msra.mxu0 %v429
        %468 = vmatprep.subr.mxu0 0.0
        %469 = vmatpush1.msra.mxu0 %v430
        %470 = vmatprep.subr.mxu0 0.0
        %471 = vmatpush1.msra.mxu0 %v431
        %472 = vmatprep.subr.mxu0 0.0
        %473 = vmatpush1.msra.mxu0 %v432
        %474 = vmatprep.subr.mxu0 0.0
        %475 = vmatpush1.msra.mxu0 %v433
        %476 = vmatprep.subr.mxu0 0.0
        %477 = vmatpush1.msra.mxu0 %v434
        %478 = vmatprep.subr.mxu0 0.0
        %479 = vmatpush1.msra.mxu0 %v435
        %480 = vmatprep.subr.mxu0 0.0
        %481 = vmatpush1.msra.mxu0 %v436
        %482 = vmatprep.subr.mxu0 0.0
        %483 = vmatpush1.msra.mxu0 %v437
        %484 = vmatprep.subr.mxu0 0.0
        %485 = vmatpush1.msra.mxu0 %v438
        %486 = vmatprep.subr.mxu0 0.0
        %487 = vmatpush1.msra.mxu0 %v439
        %488 = vmatprep.subr.mxu0 0.0
        %489 = vmatpush1.msra.mxu0 %v440
        %490 = vmatprep.subr.mxu0 0.0
        %491 = vmatpush1.msra.mxu0 %v441
        %492 = vmatprep.subr.mxu0 0.0
        %493 = vmatpush1.msra.mxu0 %v442
        %494 = vmatprep.subr.mxu0 0.0
        %495 = vmatpush1.msra.mxu0 %v443
        %496 = vmatprep.subr.mxu0 0.0
        %497 = vmatpush1.msra.mxu0 %v444
        %498 = vmatprep.subr.mxu0 0.0
        %499 = vmatpush1.msra.mxu0 %v445
        %500 = vmatprep.subr.mxu0 0.0
        %501 = vmatpush1.msra.mxu0 %v446
        %502 = vmatprep.subr.mxu0 0.0
        %503 = vmatpush1.msra.mxu0 %v447
        %504 = vmatprep.subr.mxu0 0.0
        %505 = vmatpush1.msra.mxu0 0.0
        %506 = vmatprep.subr.mxu0 0.0
        %507 = vmatpush1.msra.mxu0 0.0
        %508 = vmatprep.subr.mxu0 0.0
        %509 = vmatpush1.msra.mxu0 0.0
        %510 = vmatprep.subr.mxu0 0.0
        %511 = vmatpush1.msra.mxu0 0.0
        %512 = vmatprep.subr.mxu0 0.0
        %513 = vmatpush1.msra.mxu0 0.0
        %514 = vmatprep.subr.mxu0 0.0
        %515 = vmatpush1.msra.mxu0 0.0
        %516 = vmatprep.subr.mxu0 0.0
        %517 = vmatpush1.msra.mxu0 0.0
        %518 = vmatprep.subr.mxu0 0.0
        %519 = vmatpush1.msra.mxu0 0.0
        %520 = vmatprep.mubr.f32.mxu0 %v454
        %521 = vmatmul.mubr.f32.gmra.mrb[0].mxu0 %v423
        %v522 = vpop.f32.mrb[0].mxu0
        %v523 = vadd.f32 %v452, %v522
        %v524 = vpop.f32.mrb[0].mxu0
        %525 = vdwg.mxu0
        %v526 = vmul.f32 %v304, 2.0
        %v527 = vadd.f32 %v523, %v526
        %v528 = vld [vmem:[%s5 + $0x1] sm:$0x1]
        %v529 = vld [vmem:[%s5 + $0x2] sm:$0x1]
        %530 = vadd.xlane.f32.xlu0 %v527
        %v531 = vpop.xlane.xlu0 %530
        %v532 = vrcp.pop 128.0
        %v533 = vmul.f32 %v531, %v532
        %v534 = vsub.f32 %v527, %v533
        %v535 = vmul.f32 %v534, %v534
        %536 = vadd.xlane.f32.xlu0 %v535
        %v537 = vpop.xlane.xlu0 %536
        %v538 = vmul.f32 %v537, %v532
        %v539 = vadd.f32 %v538, 1e-12
        %v540 = vrsqrt.pop %v539
        %v541 = vmul.f32 %v534, %v540
        %v542 = vlaneseq
        %v543 = vshrl.u32 %v542, 7
        %v544 = vsub.s32 0, %v543
        %v545 = vrot.slane %v528, %v544
        %v546 = vmul.f32 %v541, %v545
        %v547 = vlaneseq
        %v548 = vshrl.u32 %v547, 7
        %v549 = vsub.s32 0, %v548
        %v550 = vrot.slane %v529, %v549
        %v551 = vadd.f32 %v546, %v550
        %552 = vst [vmem:[%s303] sm:$0xff] %v551
        %s553 = sand.u32 %s170, 1
        %s554 = scalar_lea.sflag [#allocation4], %s553
        %s555 = sand.u32 %s170, 1
        %s556 = smul.addr %s555, 8
        %s557 = scalar_lea.vmem [#allocation7], %s556
        // Predicated region
        $region53: #{tpu_custom_call.1} parent=43 // pred_check
          %p558 = pneg %p180
        $region54: #{tpu_custom_call.1} parent=43 // pred_check_branch
          %560 = sbr.rel (%p558) target = $region56
        $region55: #{tpu_custom_call.1} parent=43 // pred_region
          %s562 = ssub.s32 128, 128
          %563 = vsyncadd %s554, %s562
          %s564 = smul.addr %s26, 128
          %s565 = scalar_lea.hbm %s6, %s564
          %s567 = sshll.u32 %s557, 4
          %s568 = int_to_ptr.vmem [resolvable:$true] %s567
          %570 = dma.vmem_to_hbm [thread:$0]  %s568, 128, %s565, %s554
        $region56: #{tpu_custom_call.1} parent=43 // pred_fallthru
          _
      $region44: #{tpu_custom_call.1} parent=5 // pred_fallthru
        _
      %p571 = scmp.le.s32.totalorder 2, %s21
      // Predicated region
      $region57: #{tpu_custom_call.1} parent=5 // pred_check
        %p572 = pneg %p571
      $region58: #{tpu_custom_call.1} parent=5 // pred_check_branch
        %574 = sbr.rel (%p572) target = $region60
      $region59: #{tpu_custom_call.1} parent=5 // pred_region
        %s575 = ssub.s32 %s21, 2
        // Predicated region
        $region61: #{tpu_custom_call.1} parent=59 // pred_check
          %p576 = pneg %p186
        $region62: #{tpu_custom_call.1} parent=59 // pred_check_branch
          %578 = sbr.rel (%p576) target = $region64
        $region63: #{tpu_custom_call.1} parent=59 // pred_region
          %s579 = sand.u32 %s171, 1
          %s580 = scalar_lea.sflag [#allocation4], %s579
          %s581 = sand.u32 %s171, 1
          %s582 = smul.addr %s581, 8
          %s583 = scalar_lea.vmem [#allocation7], %s582
          %584 = dma.done %s580, 128
        $region64: #{tpu_custom_call.1} parent=59 // pred_fallthru
          _
      $region60: #{tpu_custom_call.1} parent=5 // pred_fallthru
        _
    $region6: #{tpu_custom_call.1} parent=1 // loop_footer
      %s25 = sadd.s32 1, %s21
    $region7: #{tpu_custom_call.1} parent=1 // loop_footer_branch
      %20 = sbr.rel target = $region3
    $region8: #{tpu_custom_call.1} parent=1 // loop_exit
      _
    %585 = vsyncpa [#allocation3], 1
    %s586 = scalar_lea.sflag [#allocation3], 1
    %587 = vsyncpa %s586, 1
    %588 = vsyncpa [#allocation6], 1
    %s589 = scalar_lea.sflag [#allocation6], 1
    %590 = vsyncpa %s589, 1
    %591 = vsyncpa [#allocation4], 1
    %s592 = scalar_lea.sflag [#allocation4], 1
    %593 = vsyncpa %s592, 1

// kernel: tpu_custom_call.1
$region0: #{tpu_custom_call.1}
  #allocation0 [shape = 'u32[]', space=smem, size = 0x4, offset = 0x4, fixed_abs, tag = 'smem constant byte address 0x4 - core index']
  #allocation1 [shape = 'u32[144,128]{1,0:T(1,128)}', space=vmem, size = 0x12000, scoped, tag = 'internal scratch']
  %s0 = inlined_call_operand.hbm [shape: f32[16,128], index: 0, kind: input, shape index: {}]
  %s1 = inlined_call_operand.hbm [shape: f32[16,128], index: 1, kind: input, shape index: {}]
  %s2 = inlined_call_operand.vmem [shape: f32[128,64], index: 2, kind: input, shape index: {}]
  %s3 = inlined_call_operand.vmem [shape: f32[192,128], index: 3, kind: input, shape index: {}]
  %s4 = inlined_call_operand.vmem [shape: f32[3,64], index: 4, kind: input, shape index: {}]
  %s5 = inlined_call_operand.vmem [shape: f32[3,128], index: 5, kind: input, shape index: {}]
  %s6 = inlined_call_operand.hbm [shape: f32[16,128], index: 6, kind: output, shape index: {}]
  %s7 = sld [smem:[#allocation0]]
  $region65: #{tpu_custom_call.1} parent=0
    _
  %s9 = ssub.s32 1, %s7
  %s10 = scalar_select 0, %s9, %s7
  $region1: #{tpu_custom_call.1} parent=0
    #allocation2 [shape = 'u8[8192]{0}', space=vmem, size = 0x2000, scoped, tag = 'input window, operand 0']
    #allocation3 [shape = 's32[2]{0}', space=sflag, size = 0x8, scoped, tag = 'scoped memory for tpu_custom_call.1']
    #allocation4 [shape = 's32[2]{0}', space=sflag, size = 0x8, scoped, tag = 'scoped memory for tpu_custom_call.1']
    #allocation5 [shape = 'u8[8192]{0}', space=vmem, size = 0x2000, scoped, tag = 'input window, operand 1']
    #allocation6 [shape = 's32[2]{0}', space=sflag, size = 0x8, scoped, tag = 'scoped memory for tpu_custom_call.1']
    #allocation7 [shape = 'u8[8192]{0}', space=vmem, size = 0x2000, scoped, tag = 'output window, operand 0']
    %11 = vsyncpa [#allocation3], 0
    %s12 = scalar_lea.sflag [#allocation3], 1
    %13 = vsyncpa %s12, 0
    %14 = vsyncpa [#allocation6], 0
    %s15 = scalar_lea.sflag [#allocation6], 1
    %16 = vsyncpa %s15, 0
    %17 = vsyncpa [#allocation4], 0
    %s18 = scalar_lea.sflag [#allocation4], 1
    %19 = vsyncpa %s18, 0
    loop: start=0, step=1, limit=4
    $region2: #{tpu_custom_call.1} parent=1 // loop_pre_header
      _
    $region3: #{tpu_custom_call.1} parent=1 // loop_header
      %s21 = sphi 0, %s25
      %p22 = scmp.ge.s32.totalorder %s21, 4
      %s31 = sphi 0, %s33
      %s34 = sphi 0, %s31
      %s35 = sphi 0, %s34
      %s51 = sphi 0, %s35
      %s57 = sphi 0, %s59
      %s60 = sphi 0, %s57
      %s61 = sphi 0, %s60
      %s77 = sphi 0, %s61
      %s81 = sphi 0, %s81
      %s83 = sphi 0, %s81
      %s84 = sphi 0, %s83
      %s98 = sphi 0, %s84
      %s102 = sphi 0, %s102
      %s104 = sphi 0, %s102
      %s105 = sphi 0, %s104
      %s119 = sphi 0, %s105
      %s123 = sphi 0, %s123
      %s125 = sphi 0, %s123
      %s126 = sphi 0, %s125
      %s140 = sphi 0, %s126
      %s144 = sphi 0, %s144
      %s146 = sphi 0, %s144
      %s147 = sphi 0, %s146
      %s161 = sphi 0, %s147
      %s167 = sphi 0, %s169
      %s170 = sphi 0, %s167
      %s171 = sphi 0, %s170
      %s187 = sphi 0, %s171
    $region4: #{tpu_custom_call.1} parent=1 // loop_header_branch
      %24 = sbr.rel (%p22) target = $region8
    $region5: #{tpu_custom_call.1} parent=1 // loop_body
      %s26 = ssub.s32 %s21, 1
      %s27 = ssub.s32 %s21, 2
      %s28 = sadd.s32 %s21, 1
      %s29 = ssub.s32 %s21, %s28
      %p30 = scmp.eq.s32.totalorder %s29, 0
      %s32 = sadd.s32 %s31, 1
      %s33 = scalar_select %p30, %s31, %s32
      %p36 = pneg %p30
      %p37 = scmp.eq.s32.totalorder %s21, 1
      %p38 = por %p36, %p37
      %p39 = scmp.ne.s32.totalorder %s31, %s34
      %p40 = scmp.eq.s32.totalorder %s21, 0
      %p41 = por %p39, %p40
      %p42 = scmp.ne.s32.totalorder %s31, %s34
      %p43 = scmp.eq.s32.totalorder %s26, 1
      %p44 = por %p42, %p43
      %p45 = scmp.ne.s32.totalorder %s34, %s35
      %p46 = scmp.eq.s32.totalorder %s26, 0
      %p47 = por %p45, %p46
      %p48 = scmp.ne.s32.totalorder %s34, %s35
      %p49 = scmp.eq.s32.totalorder %s27, 1
      %p50 = por %p48, %p49
      %p52 = scmp.ne.s32.totalorder %s35, %s51
      %p53 = scmp.eq.s32.totalorder %s27, 0
      %p54 = por %p52, %p53
      %s55 = ssub.s32 %s21, %s28
      %p56 = scmp.eq.s32.totalorder %s55, 0
      %s58 = sadd.s32 %s57, 1
      %s59 = scalar_select %p56, %s57, %s58
      %p62 = pneg %p56
      %p63 = scmp.eq.s32.totalorder %s21, 1
      %p64 = por %p62, %p63
      %p65 = scmp.ne.s32.totalorder %s57, %s60
      %p66 = scmp.eq.s32.totalorder %s21, 0
      %p67 = por %p65, %p66
      %p68 = scmp.ne.s32.totalorder %s57, %s60
      %p69 = scmp.eq.s32.totalorder %s26, 1
      %p70 = por %p68, %p69
      %p71 = scmp.ne.s32.totalorder %s60, %s61
      %p72 = scmp.eq.s32.totalorder %s26, 0
      %p73 = por %p71, %p72
      %p74 = scmp.ne.s32.totalorder %s60, %s61
      %p75 = scmp.eq.s32.totalorder %s27, 1
      %p76 = por %p74, %p75
      %p78 = scmp.ne.s32.totalorder %s61, %s77
      %p79 = scmp.eq.s32.totalorder %s27, 0
      %p80 = por %p78, %p79
      %s82 = sadd.s32 %s81, 1
      %p85 = scmp.eq.s32.totalorder %s21, 1
      %p86 = scmp.ne.s32.totalorder %s81, %s83
      %p87 = scmp.eq.s32.totalorder %s21, 0
      %p88 = por %p86, %p87
      %p89 = scmp.ne.s32.totalorder %s81, %s83
      %p90 = scmp.eq.s32.totalorder %s26, 1
      %p91 = por %p89, %p90
      %p92 = scmp.ne.s32.totalorder %s83, %s84
      %p93 = scmp.eq.s32.totalorder %s26, 0
      %p94 = por %p92, %p93
      %p95 = scmp.ne.s32.totalorder %s83, %s84
      %p96 = scmp.eq.s32.totalorder %s27, 1
      %p97 = por %p95, %p96
      %p99 = scmp.ne.s32.totalorder %s84, %s98
      %p100 = scmp.eq.s32.totalorder %s27, 0
      %p101 = por %p99, %p100
      %s103 = sadd.s32 %s102, 1
      %p106 = scmp.eq.s32.totalorder %s21, 1
      %p107 = scmp.ne.s32.totalorder %s102, %s104
      %p108 = scmp.eq.s32.totalorder %s21, 0
      %p109 = por %p107, %p108
      %p110 = scmp.ne.s32.totalorder %s102, %s104
      %p111 = scmp.eq.s32.totalorder %s26, 1
      %p112 = por %p110, %p111
      %p113 = scmp.ne.s32.totalorder %s104, %s105
      %p114 = scmp.eq.s32.totalorder %s26, 0
      %p115 = por %p113, %p114
      %p116 = scmp.ne.s32.totalorder %s104, %s105
      %p117 = scmp.eq.s32.totalorder %s27, 1
      %p118 = por %p116, %p117
      %p120 = scmp.ne.s32.totalorder %s105, %s119
      %p121 = scmp.eq.s32.totalorder %s27, 0
      %p122 = por %p120, %p121
      %s124 = sadd.s32 %s123, 1
      %p127 = scmp.eq.s32.totalorder %s21, 1
      %p128 = scmp.ne.s32.totalorder %s123, %s125
      %p129 = scmp.eq.s32.totalorder %s21, 0
      %p130 = por %p128, %p129
      %p131 = scmp.ne.s32.totalorder %s123, %s125
      %p132 = scmp.eq.s32.totalorder %s26, 1
      %p133 = por %p131, %p132
      %p134 = scmp.ne.s32.totalorder %s125, %s126
      %p135 = scmp.eq.s32.totalorder %s26, 0
      %p136 = por %p134, %p135
      %p137 = scmp.ne.s32.totalorder %s125, %s126
      %p138 = scmp.eq.s32.totalorder %s27, 1
      %p139 = por %p137, %p138
      %p141 = scmp.ne.s32.totalorder %s126, %s140
      %p142 = scmp.eq.s32.totalorder %s27, 0
      %p143 = por %p141, %p142
      %s145 = sadd.s32 %s144, 1
      %p148 = scmp.eq.s32.totalorder %s21, 1
      %p149 = scmp.ne.s32.totalorder %s144, %s146
      %p150 = scmp.eq.s32.totalorder %s21, 0
      %p151 = por %p149, %p150
      %p152 = scmp.ne.s32.totalorder %s144, %s146
      %p153 = scmp.eq.s32.totalorder %s26, 1
      %p154 = por %p152, %p153
      %p155 = scmp.ne.s32.totalorder %s146, %s147
      %p156 = scmp.eq.s32.totalorder %s26, 0
      %p157 = por %p155, %p156
      %p158 = scmp.ne.s32.totalorder %s146, %s147
      %p159 = scmp.eq.s32.totalorder %s27, 1
      %p160 = por %p158, %p159
      %p162 = scmp.ne.s32.totalorder %s147, %s161
      %p163 = scmp.eq.s32.totalorder %s27, 0
      %p164 = por %p162, %p163
      %s165 = ssub.s32 %s21, %s28
      %p166 = scmp.eq.s32.totalorder %s165, 0
      %s168 = sadd.s32 %s167, 1
      %s169 = scalar_select %p166, %s167, %s168
      %p172 = pneg %p166
      %p173 = scmp.eq.s32.totalorder %s21, 1
      %p174 = por %p172, %p173
      %p175 = scmp.ne.s32.totalorder %s167, %s170
      %p176 = scmp.eq.s32.totalorder %s21, 0
      %p177 = por %p175, %p176
      %p178 = scmp.ne.s32.totalorder %s167, %s170
      %p179 = scmp.eq.s32.totalorder %s26, 1
      %p180 = por %p178, %p179
      %p181 = scmp.ne.s32.totalorder %s170, %s171
      %p182 = scmp.eq.s32.totalorder %s26, 0
      %p183 = por %p181, %p182
      %p184 = scmp.ne.s32.totalorder %s170, %s171
      %p185 = scmp.eq.s32.totalorder %s27, 1
      %p186 = por %p184, %p185
      %p188 = scmp.ne.s32.totalorder %s171, %s187
      %p189 = scmp.eq.s32.totalorder %s27, 0
      %p190 = por %p188, %p189
      %p191 = scmp.le.s32.totalorder 1, %s21
      %p192 = scmp.lt.s32.totalorder %s21, 3
      %p193 = pnand %p191, %p192
      %p194 = pneg %p193
      // Predicated region
      $region9: #{tpu_custom_call.1} parent=5 // pred_check
        _
      $region10: #{tpu_custom_call.1} parent=5 // pred_check_branch
        %196 = sbr.rel (%p193) target = $region12
      $region11: #{tpu_custom_call.1} parent=5 // pred_region
        %s197 = ssub.s32 %s21, 1
        // Predicated region
        $region13: #{tpu_custom_call.1} parent=11 // pred_check
          %p198 = pneg %p94
        $region14: #{tpu_custom_call.1} parent=11 // pred_check_branch
          %200 = sbr.rel (%p198) target = $region16
        $region15: #{tpu_custom_call.1} parent=11 // pred_region
          _
        $region16: #{tpu_custom_call.1} parent=11 // pred_fallthru
          _
        // Predicated region
        $region17: #{tpu_custom_call.1} parent=11 // pred_check
          %p201 = pneg %p115
        $region18: #{tpu_custom_call.1} parent=11 // pred_check_branch
          %203 = sbr.rel (%p201) target = $region20
        $region19: #{tpu_custom_call.1} parent=11 // pred_region
          _
        $region20: #{tpu_custom_call.1} parent=11 // pred_fallthru
          _
        // Predicated region
        $region21: #{tpu_custom_call.1} parent=11 // pred_check
          %p204 = pneg %p136
        $region22: #{tpu_custom_call.1} parent=11 // pred_check_branch
          %206 = sbr.rel (%p204) target = $region24
        $region23: #{tpu_custom_call.1} parent=11 // pred_region
          _
        $region24: #{tpu_custom_call.1} parent=11 // pred_fallthru
          _
        // Predicated region
        $region25: #{tpu_custom_call.1} parent=11 // pred_check
          %p207 = pneg %p157
        $region26: #{tpu_custom_call.1} parent=11 // pred_check_branch
          %209 = sbr.rel (%p207) target = $region28
        $region27: #{tpu_custom_call.1} parent=11 // pred_region
          _
        $region28: #{tpu_custom_call.1} parent=11 // pred_fallthru
          _
      $region12: #{tpu_custom_call.1} parent=5 // pred_fallthru
        _
      %p210 = scmp.lt.s32.totalorder %s21, 2
      // Predicated region
      $region29: #{tpu_custom_call.1} parent=5 // pred_check
        %p211 = pneg %p210
      $region30: #{tpu_custom_call.1} parent=5 // pred_check_branch
        %213 = sbr.rel (%p211) target = $region32
      $region31: #{tpu_custom_call.1} parent=5 // pred_region
        // Predicated region
        $region33: #{tpu_custom_call.1} parent=31 // pred_check
          %p214 = pneg %p41
        $region34: #{tpu_custom_call.1} parent=31 // pred_check_branch
          %216 = sbr.rel (%p214) target = $region36
        $region35: #{tpu_custom_call.1} parent=31 // pred_region
          %s217 = sand.u32 %s31, 1
          %s218 = scalar_lea.sflag [#allocation3], %s217
          %s219 = sand.u32 %s31, 1
          %s220 = smul.addr %s219, 8
          %s221 = scalar_lea.vmem [#allocation2], %s220
          %s223 = ssub.s32 128, 128
          %224 = vsyncadd %s218, %s223
          %s225 = smul.addr %s21, 128
          %s226 = scalar_lea.hbm %s0, %s225
          %s228 = sshll.u32 %s221, 4
          %s229 = int_to_ptr.vmem [resolvable:$true] %s228
          %231 = dma.hbm_to_vmem [thread:$0]  %s226, 128, %s229, %s218
        $region36: #{tpu_custom_call.1} parent=31 // pred_fallthru
          _
        // Predicated region
        $region37: #{tpu_custom_call.1} parent=31 // pred_check
          %p232 = pneg %p67
        $region38: #{tpu_custom_call.1} parent=31 // pred_check_branch
          %234 = sbr.rel (%p232) target = $region40
        $region39: #{tpu_custom_call.1} parent=31 // pred_region
          %s235 = sand.u32 %s57, 1
          %s236 = scalar_lea.sflag [#allocation6], %s235
          %s237 = sand.u32 %s57, 1
          %s238 = smul.addr %s237, 8
          %s239 = scalar_lea.vmem [#allocation5], %s238
          %s241 = ssub.s32 128, 128
          %242 = vsyncadd %s236, %s241
          %s243 = smul.addr %s21, 128
          %s244 = scalar_lea.hbm %s1, %s243
          %s246 = sshll.u32 %s239, 4
          %s247 = int_to_ptr.vmem [resolvable:$true] %s246
          %249 = dma.hbm_to_vmem [thread:$0]  %s244, 128, %s247, %s236
        $region40: #{tpu_custom_call.1} parent=31 // pred_fallthru
          _
      $region32: #{tpu_custom_call.1} parent=5 // pred_fallthru
        _
      %p250 = scmp.le.s32.totalorder 1, %s21
      %p251 = scmp.lt.s32.totalorder %s21, 3
      %p252 = pnand %p250, %p251
      %p253 = pneg %p252
      // Predicated region
      $region41: #{tpu_custom_call.1} parent=5 // pred_check
        _
      $region42: #{tpu_custom_call.1} parent=5 // pred_check_branch
        %255 = sbr.rel (%p252) target = $region44
      $region43: #{tpu_custom_call.1} parent=5 // pred_region
        %s256 = ssub.s32 %s21, 1
        %s257 = sand.u32 %s34, 1
        %s258 = scalar_lea.sflag [#allocation3], %s257
        %s259 = sand.u32 %s34, 1
        %s260 = smul.addr %s259, 8
        %s261 = scalar_lea.vmem [#allocation2], %s260
        // Predicated region
        $region45: #{tpu_custom_call.1} parent=43 // pred_check
          %p262 = pneg %p47
        $region46: #{tpu_custom_call.1} parent=43 // pred_check_branch
          %264 = sbr.rel (%p262) target = $region48
        $region47: #{tpu_custom_call.1} parent=43 // pred_region
          %265 = dma.done %s258, 128
        $region48: #{tpu_custom_call.1} parent=43 // pred_fallthru
          _
        %s266 = sand.u32 %s60, 1
        %s267 = scalar_lea.sflag [#allocation6], %s266
        %s268 = sand.u32 %s60, 1
        %s269 = smul.addr %s268, 8
        %s270 = scalar_lea.vmem [#allocation5], %s269
        // Predicated region
        $region49: #{tpu_custom_call.1} parent=43 // pred_check
          %p271 = pneg %p73
        $region50: #{tpu_custom_call.1} parent=43 // pred_check_branch
          %273 = sbr.rel (%p271) target = $region52
        $region51: #{tpu_custom_call.1} parent=43 // pred_region
          %274 = dma.done %s267, 128
        $region52: #{tpu_custom_call.1} parent=43 // pred_fallthru
          _
        %s275 = sand.u32 %s34, 1
        %s276 = scalar_lea.sflag [#allocation3], %s275
        %s277 = sand.u32 %s34, 1
        %s278 = smul.addr %s277, 8
        %s279 = scalar_lea.vmem [#allocation2], %s278
        %p280 = pneg %p47
        %p281 = pneg %p44
        %s282 = sand.u32 %s60, 1
        %s283 = scalar_lea.sflag [#allocation6], %s282
        %s284 = sand.u32 %s60, 1
        %s285 = smul.addr %s284, 8
        %s286 = scalar_lea.vmem [#allocation5], %s285
        %p287 = pneg %p73
        %p288 = pneg %p70
        %p289 = pneg %p94
        %p290 = pneg %p91
        %p291 = pneg %p115
        %p292 = pneg %p112
        %p293 = pneg %p136
        %p294 = pneg %p133
        %p295 = pneg %p157
        %p296 = pneg %p154
        %p297 = pneg %p183
        %p298 = pneg %p180
        %s299 = sand.u32 %s170, 1
        %s300 = scalar_lea.sflag [#allocation4], %s299
        %s301 = sand.u32 %s170, 1
        %s302 = smul.addr %s301, 8
        %s303 = scalar_lea.vmem [#allocation7], %s302
        %v304 = vld [vmem:[%s270] sm:$0xff]
        %v305 = vld [vmem:[%s2] sm:$0xff]
        %v306 = vld [vmem:[%s2 + $0x8] sm:$0xff]
        %v307 = vld [vmem:[%s2 + $0x10] sm:$0xff]
        %v308 = vld [vmem:[%s2 + $0x18] sm:$0xff]
        %v309 = vld [vmem:[%s2 + $0x20] sm:$0xff]
        %v310 = vld [vmem:[%s2 + $0x28] sm:$0xff]
        %v311 = vld [vmem:[%s2 + $0x30] sm:$0xff]
        %v312 = vld [vmem:[%s2 + $0x38] sm:$0xff]
        %v313 = vld [vmem:[%s2 + $0x40] sm:$0xff]
        %v314 = vld [vmem:[%s2 + $0x48] sm:$0xff]
        %v315 = vld [vmem:[%s2 + $0x50] sm:$0xff]
        %v316 = vld [vmem:[%s2 + $0x58] sm:$0xff]
        %v317 = vld [vmem:[%s2 + $0x60] sm:$0xff]
        %v318 = vld [vmem:[%s2 + $0x68] sm:$0xff]
        %v319 = vld [vmem:[%s2 + $0x70] sm:$0xff]
        %v320 = vld [vmem:[%s2 + $0x78] sm:$0xff]
        %v321 = vld [vmem:[%s4] sm:$0x1]
        %v322 = vlaneseq
        %v323 = vshrl.u32 %v322, 7
        %v324 = vsub.s32 0, %v323
        %v325 = vrot.slane %v321, %v324
        %326 = vmatprep.subr.mxu0 0.0
        %327 = vmatpush1.msra.mxu0 %v305
        %328 = vmatprep.subr.mxu0 0.0
        %329 = vmatpush1.msra.mxu0 %v306
        %330 = vmatprep.subr.mxu0 0.0
        %331 = vmatpush1.msra.mxu0 %v307
        %332 = vmatprep.subr.mxu0 0.0
        %333 = vmatpush1.msra.mxu0 %v308
        %334 = vmatprep.subr.mxu0 0.0
        %335 = vmatpush1.msra.mxu0 %v309
        %336 = vmatprep.subr.mxu0 0.0
        %337 = vmatpush1.msra.mxu0 %v310
        %338 = vmatprep.subr.mxu0 0.0
        %339 = vmatpush1.msra.mxu0 %v311
        %340 = vmatprep.subr.mxu0 0.0
        %341 = vmatpush1.msra.mxu0 %v312
        %342 = vmatprep.subr.mxu0 0.0
        %343 = vmatpush1.msra.mxu0 %v313
        %344 = vmatprep.subr.mxu0 0.0
        %345 = vmatpush1.msra.mxu0 %v314
        %346 = vmatprep.subr.mxu0 0.0
        %347 = vmatpush1.msra.mxu0 %v315
        %348 = vmatprep.subr.mxu0 0.0
        %349 = vmatpush1.msra.mxu0 %v316
        %350 = vmatprep.subr.mxu0 0.0
        %351 = vmatpush1.msra.mxu0 %v317
        %352 = vmatprep.subr.mxu0 0.0
        %353 = vmatpush1.msra.mxu0 %v318
        %354 = vmatprep.subr.mxu0 0.0
        %355 = vmatpush1.msra.mxu0 %v319
        %356 = vmatprep.subr.mxu0 0.0
        %357 = vmatpush1.msra.mxu0 %v320
        %358 = vmatprep.subr.mxu0 0.0
        %359 = vmatpush1.msra.mxu0 0.0
        %360 = vmatprep.subr.mxu0 0.0
        %361 = vmatpush1.msra.mxu0 0.0
        %362 = vmatprep.subr.mxu0 0.0
        %363 = vmatpush1.msra.mxu0 0.0
        %364 = vmatprep.subr.mxu0 0.0
        %365 = vmatpush1.msra.mxu0 0.0
        %366 = vmatprep.subr.mxu0 0.0
        %367 = vmatpush1.msra.mxu0 0.0
        %368 = vmatprep.subr.mxu0 0.0
        %369 = vmatpush1.msra.mxu0 0.0
        %370 = vmatprep.subr.mxu0 0.0
        %371 = vmatpush1.msra.mxu0 0.0
        %372 = vmatprep.subr.mxu0 0.0
        %373 = vmatpush1.msra.mxu0 0.0
        %374 = vmatprep.subr.mxu0 0.0
        %375 = vmatpush1.msra.mxu0 0.0
        %376 = vmatprep.subr.mxu0 0.0
        %377 = vmatpush1.msra.mxu0 0.0
        %378 = vmatprep.subr.mxu0 0.0
        %379 = vmatpush1.msra.mxu0 0.0
        %380 = vmatprep.subr.mxu0 0.0
        %381 = vmatpush1.msra.mxu0 0.0
        %382 = vmatprep.subr.mxu0 0.0
        %383 = vmatpush1.msra.mxu0 0.0
        %384 = vmatprep.subr.mxu0 0.0
        %385 = vmatpush1.msra.mxu0 0.0
        %386 = vmatprep.subr.mxu0 0.0
        %387 = vmatpush1.msra.mxu0 0.0
        %388 = vmatprep.subr.mxu0 0.0
        %389 = vmatpush1.msra.mxu0 0.0
        %390 = vmatprep.mubr.f32.mxu0 0.0
        %391 = vmatmul.mubr.f32.gmra.mrb[0].mxu0 %v304
        %v392 = vpop.f32.mrb[0].mxu0
        %v393 = vadd.f32 %v325, %v392
        %v394 = vpop.f32.mrb[0].mxu0
        %395 = vdwg.mxu0
        %v396 = vld [vmem:[%s4 + $0x1] sm:$0x1]
        %v397 = vld [vmem:[%s4 + $0x2] sm:$0x1]
        %vm398 = vcmask 523264
        %v399 = vsel %vm398, %v393, 0.0
        %400 = vadd.xlane.f32.xlu0 %v399
        %v401 = vpop.xlane.xlu0 %400
        %v402 = vrcp.pop 64.0
        %v403 = vmul.f32 %v401, %v402
        %v404 = vsub.f32 %v393, %v403
        %v405 = vmul.f32 %v404, %v404
        %v406 = vsel %vm398, %v405, 0.0
        %407 = vadd.xlane.f32.xlu0 %v406
        %v408 = vpop.xlane.xlu0 %407
        %v409 = vmul.f32 %v408, %v402
        %v410 = vadd.f32 %v409, 1e-12
        %v411 = vrsqrt.pop %v410
        %v412 = vmul.f32 %v404, %v411
        %v413 = vlaneseq
        %v414 = vshrl.u32 %v413, 7
        %v415 = vsub.s32 0, %v414
        %v416 = vrot.slane %v396, %v415
        %v417 = vmul.f32 %v412, %v416
        %v418 = vlaneseq
        %v419 = vshrl.u32 %v418, 7
        %v420 = vsub.s32 0, %v419
        %v421 = vrot.slane %v397, %v420
        %v422 = vadd.f32 %v417, %v421
        %v423 = vld [vmem:[%s261] sm:$0xff]
        %v424 = vld [vmem:[%s3] sm:$0xff]
        %v425 = vld [vmem:[%s3 + $0x8] sm:$0xff]
        %v426 = vld [vmem:[%s3 + $0x10] sm:$0xff]
        %v427 = vld [vmem:[%s3 + $0x18] sm:$0xff]
        %v428 = vld [vmem:[%s3 + $0x20] sm:$0xff]
        %v429 = vld [vmem:[%s3 + $0x28] sm:$0xff]
        %v430 = vld [vmem:[%s3 + $0x30] sm:$0xff]
        %v431 = vld [vmem:[%s3 + $0x38] sm:$0xff]
        %v432 = vld [vmem:[%s3 + $0x40] sm:$0xff]
        %v433 = vld [vmem:[%s3 + $0x48] sm:$0xff]
        %v434 = vld [vmem:[%s3 + $0x50] sm:$0xff]
        %v435 = vld [vmem:[%s3 + $0x58] sm:$0xff]
        %v436 = vld [vmem:[%s3 + $0x60] sm:$0xff]
        %v437 = vld [vmem:[%s3 + $0x68] sm:$0xff]
        %v438 = vld [vmem:[%s3 + $0x70] sm:$0xff]
        %v439 = vld [vmem:[%s3 + $0x78] sm:$0xff]
        %v440 = vld [vmem:[%s3 + $0x80] sm:$0xff]
        %v441 = vld [vmem:[%s3 + $0x88] sm:$0xff]
        %v442 = vld [vmem:[%s3 + $0x90] sm:$0xff]
        %v443 = vld [vmem:[%s3 + $0x98] sm:$0xff]
        %v444 = vld [vmem:[%s3 + $0xa0] sm:$0xff]
        %v445 = vld [vmem:[%s3 + $0xa8] sm:$0xff]
        %v446 = vld [vmem:[%s3 + $0xb0] sm:$0xff]
        %v447 = vld [vmem:[%s3 + $0xb8] sm:$0xff]
        %v449 = vsel %vm398, %v422, 0
        %451 = vmatprep.subr.mxu0 0.0
        %452 = vmatpush1.msra.mxu0 %v440
        %453 = vmatprep.subr.mxu0 0.0
        %454 = vmatpush1.msra.mxu0 %v441
        %455 = vmatprep.subr.mxu0 0.0
        %456 = vmatpush1.msra.mxu0 %v442
        %457 = vmatprep.subr.mxu0 0.0
        %458 = vmatpush1.msra.mxu0 %v443
        %459 = vmatprep.subr.mxu0 0.0
        %460 = vmatpush1.msra.mxu0 %v444
        %461 = vmatprep.subr.mxu0 0.0
        %462 = vmatpush1.msra.mxu0 %v445
        %463 = vmatprep.subr.mxu0 0.0
        %464 = vmatpush1.msra.mxu0 %v446
        %465 = vmatprep.subr.mxu0 0.0
        %466 = vmatpush1.msra.mxu0 %v447
        %467 = vmatprep.subr.mxu0 0.0
        %468 = vmatpush1.msra.mxu0 0.0
        %469 = vmatprep.subr.mxu0 0.0
        %470 = vmatpush1.msra.mxu0 0.0
        %471 = vmatprep.subr.mxu0 0.0
        %472 = vmatpush1.msra.mxu0 0.0
        %473 = vmatprep.subr.mxu0 0.0
        %474 = vmatpush1.msra.mxu0 0.0
        %475 = vmatprep.subr.mxu0 0.0
        %476 = vmatpush1.msra.mxu0 0.0
        %477 = vmatprep.subr.mxu0 0.0
        %478 = vmatpush1.msra.mxu0 0.0
        %479 = vmatprep.subr.mxu0 0.0
        %480 = vmatpush1.msra.mxu0 0.0
        %481 = vmatprep.subr.mxu0 0.0
        %482 = vmatpush1.msra.mxu0 0.0
        %483 = vmatprep.subr.mxu0 0.0
        %484 = vmatpush1.msra.mxu0 0.0
        %485 = vmatprep.subr.mxu0 0.0
        %486 = vmatpush1.msra.mxu0 0.0
        %487 = vmatprep.subr.mxu0 0.0
        %488 = vmatpush1.msra.mxu0 0.0
        %489 = vmatprep.subr.mxu0 0.0
        %490 = vmatpush1.msra.mxu0 0.0
        %491 = vmatprep.subr.mxu0 0.0
        %492 = vmatpush1.msra.mxu0 0.0
        %493 = vmatprep.subr.mxu0 0.0
        %494 = vmatpush1.msra.mxu0 0.0
        %495 = vmatprep.subr.mxu0 0.0
        %496 = vmatpush1.msra.mxu0 0.0
        %497 = vmatprep.subr.mxu0 0.0
        %498 = vmatpush1.msra.mxu0 0.0
        %499 = vmatprep.subr.mxu0 0.0
        %500 = vmatpush1.msra.mxu0 0.0
        %501 = vmatprep.subr.mxu0 0.0
        %502 = vmatpush1.msra.mxu0 0.0
        %503 = vmatprep.subr.mxu0 0.0
        %504 = vmatpush1.msra.mxu0 0.0
        %505 = vmatprep.subr.mxu0 0.0
        %506 = vmatpush1.msra.mxu0 0.0
        %507 = vmatprep.subr.mxu0 0.0
        %508 = vmatpush1.msra.mxu0 0.0
        %509 = vmatprep.subr.mxu0 0.0
        %510 = vmatpush1.msra.mxu0 0.0
        %511 = vmatprep.subr.mxu0 0.0
        %512 = vmatpush1.msra.mxu0 0.0
        %513 = vmatprep.subr.mxu0 0.0
        %514 = vmatpush1.msra.mxu0 0.0
        %515 = vmatprep.mubr.f32.mxu0 0.0
        %516 = vmatmul.mubr.f32.gmra.mrb[0].mxu0 %v449
        %v517 = vpop.f32.mrb[0].mxu0
        %v518 = vadd.f32 0.0, %v517
        %v519 = vpop.f32.mrb[0].mxu0
        %520 = vdwg.mxu0
        %521 = vmatprep.subr.mxu0 0.0
        %522 = vmatpush1.msra.mxu0 %v424
        %523 = vmatprep.subr.mxu0 0.0
        %524 = vmatpush1.msra.mxu0 %v425
        %525 = vmatprep.subr.mxu0 0.0
        %526 = vmatpush1.msra.mxu0 %v426
        %527 = vmatprep.subr.mxu0 0.0
        %528 = vmatpush1.msra.mxu0 %v427
        %529 = vmatprep.subr.mxu0 0.0
        %530 = vmatpush1.msra.mxu0 %v428
        %531 = vmatprep.subr.mxu0 0.0
        %532 = vmatpush1.msra.mxu0 %v429
        %533 = vmatprep.subr.mxu0 0.0
        %534 = vmatpush1.msra.mxu0 %v430
        %535 = vmatprep.subr.mxu0 0.0
        %536 = vmatpush1.msra.mxu0 %v431
        %537 = vmatprep.subr.mxu0 0.0
        %538 = vmatpush1.msra.mxu0 %v432
        %539 = vmatprep.subr.mxu0 0.0
        %540 = vmatpush1.msra.mxu0 %v433
        %541 = vmatprep.subr.mxu0 0.0
        %542 = vmatpush1.msra.mxu0 %v434
        %543 = vmatprep.subr.mxu0 0.0
        %544 = vmatpush1.msra.mxu0 %v435
        %545 = vmatprep.subr.mxu0 0.0
        %546 = vmatpush1.msra.mxu0 %v436
        %547 = vmatprep.subr.mxu0 0.0
        %548 = vmatpush1.msra.mxu0 %v437
        %549 = vmatprep.subr.mxu0 0.0
        %550 = vmatpush1.msra.mxu0 %v438
        %551 = vmatprep.subr.mxu0 0.0
        %552 = vmatpush1.msra.mxu0 %v439
        %553 = vmatprep.subr.mxu0 0.0
        %554 = vmatpush1.msra.mxu0 0.0
        %555 = vmatprep.subr.mxu0 0.0
        %556 = vmatpush1.msra.mxu0 0.0
        %557 = vmatprep.subr.mxu0 0.0
        %558 = vmatpush1.msra.mxu0 0.0
        %559 = vmatprep.subr.mxu0 0.0
        %560 = vmatpush1.msra.mxu0 0.0
        %561 = vmatprep.subr.mxu0 0.0
        %562 = vmatpush1.msra.mxu0 0.0
        %563 = vmatprep.subr.mxu0 0.0
        %564 = vmatpush1.msra.mxu0 0.0
        %565 = vmatprep.subr.mxu0 0.0
        %566 = vmatpush1.msra.mxu0 0.0
        %567 = vmatprep.subr.mxu0 0.0
        %568 = vmatpush1.msra.mxu0 0.0
        %569 = vmatprep.subr.mxu0 0.0
        %570 = vmatpush1.msra.mxu0 0.0
        %571 = vmatprep.subr.mxu0 0.0
        %572 = vmatpush1.msra.mxu0 0.0
        %573 = vmatprep.subr.mxu0 0.0
        %574 = vmatpush1.msra.mxu0 0.0
        %575 = vmatprep.subr.mxu0 0.0
        %576 = vmatpush1.msra.mxu0 0.0
        %577 = vmatprep.subr.mxu0 0.0
        %578 = vmatpush1.msra.mxu0 0.0
        %579 = vmatprep.subr.mxu0 0.0
        %580 = vmatpush1.msra.mxu0 0.0
        %581 = vmatprep.subr.mxu0 0.0
        %582 = vmatpush1.msra.mxu0 0.0
        %583 = vmatprep.subr.mxu0 0.0
        %584 = vmatpush1.msra.mxu0 0.0
        %585 = vmatprep.mubr.f32.mxu0 0.0
        %586 = vmatmul.mubr.f32.gmra.mrb[0].mxu0 %v423
        %v587 = vpop.f32.mrb[0].mxu0
        %v588 = vadd.f32 %v518, %v587
        %v589 = vpop.f32.mrb[0].mxu0
        %590 = vdwg.mxu0
        %v591 = vld [vmem:[%s5] sm:$0x1]
        %v592 = vlaneseq
        %v593 = vshrl.u32 %v592, 7
        %v594 = vsub.s32 0, %v593
        %v595 = vrot.slane %v591, %v594
        %v596 = vadd.f32 %v588, %v595
        %v597 = vmul.f32 %v304, 2.0
        %v598 = vadd.f32 %v596, %v597
        %v599 = vld [vmem:[%s5 + $0x1] sm:$0x1]
        %v600 = vld [vmem:[%s5 + $0x2] sm:$0x1]
        %601 = vadd.xlane.f32.xlu0 %v598
        %v602 = vpop.xlane.xlu0 %601
        %v603 = vrcp.pop 128.0
        %v604 = vmul.f32 %v602, %v603
        %v605 = vsub.f32 %v598, %v604
        %v606 = vmul.f32 %v605, %v605
        %607 = vadd.xlane.f32.xlu0 %v606
        %v608 = vpop.xlane.xlu0 %607
        %v609 = vmul.f32 %v608, %v603
        %v610 = vadd.f32 %v609, 1e-12
        %v611 = vrsqrt.pop %v610
        %v612 = vmul.f32 %v605, %v611
        %v613 = vlaneseq
        %v614 = vshrl.u32 %v613, 7
        %v615 = vsub.s32 0, %v614
        %v616 = vrot.slane %v599, %v615
        %v617 = vmul.f32 %v612, %v616
        %v618 = vlaneseq
        %v619 = vshrl.u32 %v618, 7
        %v620 = vsub.s32 0, %v619
        %v621 = vrot.slane %v600, %v620
        %v622 = vadd.f32 %v617, %v621
        %623 = vst [vmem:[%s303] sm:$0xff] %v622
        %s624 = sand.u32 %s170, 1
        %s625 = scalar_lea.sflag [#allocation4], %s624
        %s626 = sand.u32 %s170, 1
        %s627 = smul.addr %s626, 8
        %s628 = scalar_lea.vmem [#allocation7], %s627
        // Predicated region
        $region53: #{tpu_custom_call.1} parent=43 // pred_check
          %p629 = pneg %p180
        $region54: #{tpu_custom_call.1} parent=43 // pred_check_branch
          %631 = sbr.rel (%p629) target = $region56
        $region55: #{tpu_custom_call.1} parent=43 // pred_region
          %s633 = ssub.s32 128, 128
          %634 = vsyncadd %s625, %s633
          %s635 = smul.addr %s26, 128
          %s636 = scalar_lea.hbm %s6, %s635
          %s638 = sshll.u32 %s628, 4
          %s639 = int_to_ptr.vmem [resolvable:$true] %s638
          %641 = dma.vmem_to_hbm [thread:$0]  %s639, 128, %s636, %s625
        $region56: #{tpu_custom_call.1} parent=43 // pred_fallthru
          _
      $region44: #{tpu_custom_call.1} parent=5 // pred_fallthru
        _
      %p642 = scmp.le.s32.totalorder 2, %s21
      // Predicated region
      $region57: #{tpu_custom_call.1} parent=5 // pred_check
        %p643 = pneg %p642
      $region58: #{tpu_custom_call.1} parent=5 // pred_check_branch
        %645 = sbr.rel (%p643) target = $region60
      $region59: #{tpu_custom_call.1} parent=5 // pred_region
        %s646 = ssub.s32 %s21, 2
        // Predicated region
        $region61: #{tpu_custom_call.1} parent=59 // pred_check
          %p647 = pneg %p186
        $region62: #{tpu_custom_call.1} parent=59 // pred_check_branch
          %649 = sbr.rel (%p647) target = $region64
        $region63: #{tpu_custom_call.1} parent=59 // pred_region
          %s650 = sand.u32 %s171, 1
          %s651 = scalar_lea.sflag [#allocation4], %s650
          %s652 = sand.u32 %s171, 1
          %s653 = smul.addr %s652, 8
          %s654 = scalar_lea.vmem [#allocation7], %s653
          %655 = dma.done %s651, 128
        $region64: #{tpu_custom_call.1} parent=59 // pred_fallthru
          _
      $region60: #{tpu_custom_call.1} parent=5 // pred_fallthru
        _
    $region6: #{tpu_custom_call.1} parent=1 // loop_footer
      %s25 = sadd.s32 1, %s21
    $region7: #{tpu_custom_call.1} parent=1 // loop_footer_branch
      %20 = sbr.rel target = $region3
    $region8: #{tpu_custom_call.1} parent=1 // loop_exit
      _
    %656 = vsyncpa [#allocation3], 1
    %s657 = scalar_lea.sflag [#allocation3], 1
    %658 = vsyncpa %s657, 1
    %659 = vsyncpa [#allocation6], 1
    %s660 = scalar_lea.sflag [#allocation6], 1
    %661 = vsyncpa %s660, 1
    %662 = vsyncpa [#allocation4], 1
    %s663 = scalar_lea.sflag [#allocation4], 1
    %664 = vsyncpa %s663, 1

</llo_original>
